<compile_context>
chip_gen: v7x
topology: tpu7x:2x2x1
jax: 0.10.0
libtpu: 0.0.40
codegen_flags: <defaults>
</compile_context>

<pallas_src>
import jax
import jax.numpy as jnp
from jax.experimental import pallas as pl
from jax.experimental.pallas import tpu as pltpu

LANE = 128
TILE_LANES = 2048   # max lanes per grid step (bf16 blocks stay << 32 MiB VMEM)


def _round_up(x, m):
    return (x + m - 1) // m * m


def _pick_tile(m128):
    """Largest lane tile <= TILE_LANES that still yields >=2 grid steps when the
    lane extent allows it (so dimension_semantics=('parallel',) can shard the
    grid across v7x's two TensorCores)."""
    nb = m128 // LANE
    if nb <= 1:
        return LANE
    return min(TILE_LANES, LANE * ((nb + 1) // 2))


_COMPILER_PARAMS = pltpu.CompilerParams(
    dimension_semantics=("parallel",),      # megacore split of the lane grid
    vmem_limit_bytes=32 * 1024 * 1024,      # explicit; fits every generation
)


# ----------------------------------------------------------------------------
# Pallas kernels
# ----------------------------------------------------------------------------
def _conv_pool_kernel(cols_ref, w_ref, b_ref, o_ref):
    """Fused conv (as matmul) + bias + ReLU + 2x2 maxpool.

    cols_ref: (4, K, T) bf16  im2col columns grouped by pool-window position
    w_ref:    (Cout, K) bf16
    b_ref:    (Cout, 1) f32
    o_ref:    (Cout, T) bf16  pooled activations, lane-dense spatial/batch axis
    """
    w = w_ref[...]
    m = jnp.dot(w, cols_ref[0], preferred_element_type=jnp.float32)
    for g in range(1, 4):
        m = jnp.maximum(
            m, jnp.dot(w, cols_ref[g], preferred_element_type=jnp.float32))
    # max_g(relu(y_g + b)) == relu(max_g(y_g) + b)
    o_ref[...] = jnp.maximum(m + b_ref[...], 0.0).astype(o_ref.dtype)


def _fc_fused_kernel(x_ref, w1_ref, b1_ref, w2_ref, b2_ref, w3_ref, b3_ref,
                     o_ref):
    """fc1(+ReLU) -> fc2(+ReLU) -> fc3, chained in one kernel.

    x_ref: (400, T) bf16 (features x batch); weights (out, in) bf16;
    biases (out, 1) f32; o_ref (16, T) f32 (rows 10..15 are zero padding).
    """
    h = jnp.dot(w1_ref[...], x_ref[...], preferred_element_type=jnp.float32)
    h = jnp.maximum(h + b1_ref[...], 0.0).astype(jnp.bfloat16)
    h = jnp.dot(w2_ref[...], h, preferred_element_type=jnp.float32)
    h = jnp.maximum(h + b2_ref[...], 0.0).astype(jnp.bfloat16)
    o = jnp.dot(w3_ref[...], h, preferred_element_type=jnp.float32)
    o_ref[...] = o + b3_ref[...]


# ----------------------------------------------------------------------------
# Pallas wrappers
# ----------------------------------------------------------------------------
def _conv_pool(cols, w, b):
    """cols: (4, K, M) bf16, w: (Cout, K) bf16, b: (Cout, 1) f32
       -> (Cout, M_pad) bf16 pooled activations (padded lanes contain junk)."""
    _, k, m = cols.shape
    cout = w.shape[0]
    m128 = _round_up(m, LANE)
    tile = _pick_tile(m128)
    m_pad = _round_up(m128, tile)
    cols = jnp.pad(cols, ((0, 0), (0, 0), (0, m_pad - m)))   # already bf16
    return pl.pallas_call(
        _conv_pool_kernel,
        out_shape=jax.ShapeDtypeStruct((cout, m_pad), jnp.bfloat16),
        grid=(m_pad // tile,),
        in_specs=[
            pl.BlockSpec((4, k, tile), lambda i: (0, 0, i)),
            pl.BlockSpec((cout, k), lambda i: (0, 0)),
            pl.BlockSpec((cout, 1), lambda i: (0, 0)),
        ],
        out_specs=pl.BlockSpec((cout, tile), lambda i: (0, i)),
        compiler_params=_COMPILER_PARAMS,
    )(cols, w, b)


def _fc_fused(feat, p):
    """feat: (400, N) bf16 -> (16, N_pad) f32 logits (rows>=10 / cols>=N junk)."""
    k1, n = feat.shape
    n128 = _round_up(n, LANE)
    tile = _pick_tile(n128)
    n_pad = _round_up(n128, tile)
    x = jnp.pad(feat, ((0, 0), (0, n_pad - n)))               # already bf16
    w1, b1 = p["fc1_w"], p["fc1_b"]
    w2, b2 = p["fc2_w"], p["fc2_b"]
    w3, b3 = p["fc3_w"], p["fc3_b"]
    full = lambda a: pl.BlockSpec(a.shape, lambda i: (0,) * a.ndim)
    return pl.pallas_call(
        _fc_fused_kernel,
        out_shape=jax.ShapeDtypeStruct((w3.shape[0], n_pad), jnp.float32),
        grid=(n_pad // tile,),
        in_specs=[pl.BlockSpec((k1, tile), lambda i: (0, i)),
                  full(w1), full(b1), full(w2), full(b2), full(w3), full(b3)],
        out_specs=pl.BlockSpec((w3.shape[0], tile), lambda i: (0, i)),
        compiler_params=_COMPILER_PARAMS,
    )(x, w1, b1, w2, b2, w3, b3)


# ----------------------------------------------------------------------------
# JAX glue: pool-grouped im2col, batch-innermost (stride-1 conv, even Ho/Wo)
# ----------------------------------------------------------------------------
def _im2col_pooled(x_chwn, kh, kw):
    """x: (C, H, W, N) bf16 -> cols (4, C*kh*kw, Hp*Wp*N), plus (Hp, Wp).

    Columns are grouped by 2x2 pool-window position (dh, dw) on the leading
    axis so the conv kernel can fuse the maxpool.  K ordering is (c, ki, kj),
    matching PyTorch's weight.reshape(Cout, Cin*kh*kw).  The M (lane) axis is
    ordered (h, w, n) with batch INNERMOST, so downstream hand-offs are pure
    row-major reshapes (no transposes) and the strided slices here keep the
    contiguous batch dim minor.
    """
    c, h, w, n = x_chwn.shape
    ho, wo = h - kh + 1, w - kw + 1
    hp, wp = ho // 2, wo // 2
    groups = []
    for dh in range(2):
        for dw in range(2):
            pats = []
            for ki in range(kh):
                for kj in range(kw):
                    sl = x_chwn[:,
                                dh + ki:dh + ki + 2 * hp:2,
                                dw + kj:dw + kj + 2 * wp:2, :]   # (C, Hp, Wp, N)
                    pats.append(sl)
            g = jnp.stack(pats, axis=1)                  # (C, kh*kw, Hp, Wp, N)
            groups.append(g.reshape(c * kh * kw, hp * wp * n))
    return jnp.stack(groups, axis=0), hp, wp


# ----------------------------------------------------------------------------
# CNN forward (matches the PyTorch module)
# ----------------------------------------------------------------------------
def cnn_forward(x, params):
    """x: (N, 1, 28, 28) NCHW -> logits (N, 10) f32."""
    n = x.shape[0]
    # cast to bf16 BEFORE any layout work so the dominant streams are bf16
    xb = x.astype(jnp.bfloat16)
    # conv1: Conv2d(1, 6, 5, stride=1, pad=2) + ReLU + MaxPool2d(2, 2)
    xc = jnp.transpose(xb, (1, 2, 3, 0))                         # (1, 28, 28, N)
    xc = jnp.pad(xc, ((0, 0), (2, 2), (2, 2), (0, 0)))           # (1, 32, 32, N)
    cols1, hp1, wp1 = _im2col_pooled(xc, 5, 5)                   # (4, 25, 196*N)
    r1 = _conv_pool(cols1, params["conv1_w"], params["conv1_b"])  # (8, M1_pad) bf16
    x2 = r1[:, :hp1 * wp1 * n].reshape(r1.shape[0], hp1, wp1, n)  # (8, 14, 14, N)
    # conv2: Conv2d(6, 16, 5) + ReLU + MaxPool2d(2, 2) (input chans padded 6->8)
    cols2, hp2, wp2 = _im2col_pooled(x2, 5, 5)                   # (4, 200, 25*N)
    r2 = _conv_pool(cols2, params["conv2_w"], params["conv2_b"])  # (16, M2_pad) bf16
    # torch .view(B, -1) order is (c, h, w); with batch-innermost lanes this is
    # a pure row-major reshape (no transpose): (16, 25*N) -> (400, N)
    feat = r2[:, :hp2 * wp2 * n].reshape(r2.shape[0] * hp2 * wp2, n)
    # fc1 + ReLU -> fc2 + ReLU -> fc3, single fused kernel
    out = _fc_fused(feat, params)                                # (16, N_pad) f32
    return jnp.transpose(out[:10, :n])                           # (N, 10)


# ----------------------------------------------------------------------------
# Parameter packing (folds all weight reshapes/transposes/padding into init)
# ----------------------------------------------------------------------------
def pack_params(torch_params):
    """PyTorch-layout fp32 tensors -> kernel layout.

    Conv weights -> (Cout_pad, Cin_pad*kh*kw) bf16, fc weights -> (out_pad, in)
    bf16 (W @ x orientation, so torch's (out, in) needs no transpose),
    biases -> (out_pad, 1) f32.  Padded rows / input channels are zero.
    """
    def pad_rows(a, rows):
        return jnp.pad(a, ((0, rows - a.shape[0]),) + ((0, 0),) * (a.ndim - 1))

    p = {}
    c1w = torch_params["conv1_w"].reshape(6, 25)
    p["conv1_w"] = pad_rows(c1w, 8).astype(jnp.bfloat16)                  # (8, 25)
    p["conv1_b"] = pad_rows(torch_params["conv1_b"].reshape(6, 1), 8)     # (8, 1)
    c2w = jnp.pad(torch_params["conv2_w"], ((0, 0), (0, 2), (0, 0), (0, 0)))
    p["conv2_w"] = c2w.reshape(16, 200).astype(jnp.bfloat16)              # (16, 200)
    p["conv2_b"] = torch_params["conv2_b"].reshape(16, 1)                 # (16, 1)
    p["fc1_w"] = torch_params["fc1_w"].astype(jnp.bfloat16)               # (120, 400)
    p["fc1_b"] = torch_params["fc1_b"].reshape(120, 1)
    p["fc2_w"] = torch_params["fc2_w"].astype(jnp.bfloat16)               # (84, 120)
    p["fc2_b"] = torch_params["fc2_b"].reshape(84, 1)
    p["fc3_w"] = pad_rows(torch_params["fc3_w"], 16).astype(jnp.bfloat16) # (16, 84)
    p["fc3_b"] = pad_rows(torch_params["fc3_b"].reshape(10, 1), 16)       # (16, 1)
    return p


def init_params(key):
    ks = jax.random.split(key, 10)
    s = 0.05

    def nrm(k, shape):
        return s * jax.random.normal(k, shape, jnp.float32)

    torch_params = {
        "conv1_w": nrm(ks[0], (6, 1, 5, 5)), "conv1_b": nrm(ks[1], (6,)),
        "conv2_w": nrm(ks[2], (16, 6, 5, 5)), "conv2_b": nrm(ks[3], (16,)),
        "fc1_w": nrm(ks[4], (120, 16 * 5 * 5)), "fc1_b": nrm(ks[5], (120,)),
        "fc2_w": nrm(ks[6], (84, 120)), "fc2_b": nrm(ks[7], (84,)),
        "fc3_w": nrm(ks[8], (10, 84)), "fc3_b": nrm(ks[9], (10,)),
    }
    return pack_params(torch_params)


if __name__ == "__main__":
    key = jax.random.PRNGKey(0)
    k_x, k_p = jax.random.split(key)
    params = init_params(k_p)
    # MNIST-shaped input is required by the 16*5*5 flatten; small batch of 2.
    x = jax.random.normal(k_x, (2, 1, 28, 28), jnp.float32)

    logits = jax.jit(cnn_forward)(x, params)
    logits = jax.block_until_ready(logits)

    assert logits.shape == (2, 10), logits.shape
    assert bool(jnp.all(jnp.isfinite(logits)))
    print("KERNEL_OK")
</pallas_src>

<mosaic_0001>
module attributes {stable_mosaic.version = 11 : i64} {
  func.func @_conv_pool_kernel(%arg0: i32, %arg1: memref<4x25x256xbf16, #tpu.memory_space<vmem>>, %arg2: memref<8x25xbf16, #tpu.memory_space<vmem>>, %arg3: memref<8x1xf32, #tpu.memory_space<vmem>>, %arg4: memref<8x256xbf16, #tpu.memory_space<vmem>>) attributes {dimension_semantics = [#tpu.dimension_semantics<parallel>], iteration_bounds = array<i64: 2>, scalar_prefetch = 0 : i64, scratch_operands = 0 : i64, tpu.core_type = #tpu.core_type<tc>, window_params = [{transform_indices = @transform_0, window_bounds = array<i64: 4, 25, 256>}, {pipeline_mode = #tpu.pipeline_mode<synchronous>, transform_indices = @transform_1, window_bounds = array<i64: 8, 25>}, {pipeline_mode = #tpu.pipeline_mode<synchronous>, transform_indices = @transform_2, window_bounds = array<i64: 8, 1>}, {transform_indices = @transform_3, window_bounds = array<i64: 8, 256>}]} {
    %c0 = arith.constant 0 : index
    %c0_0 = arith.constant 0 : index
    %0 = vector.load %arg2[%c0, %c0_0] : memref<8x25xbf16, #tpu.memory_space<vmem>>, vector<8x25xbf16>
    %c0_1 = arith.constant 0 : index
    %c0_2 = arith.constant 0 : index
    %c0_3 = arith.constant 0 : index
    %1 = vector.load %arg1[%c0_1, %c0_2, %c0_3] : memref<4x25x256xbf16, #tpu.memory_space<vmem>>, vector<1x25x256xbf16>
    %2 = vector.shape_cast %1 : vector<1x25x256xbf16> to vector<25x256xbf16>
    %cst = arith.constant dense<0.000000e+00> : vector<8x256xf32>
    %3 = tpu.matmul %0, %2, %cst {dimension_numbers = #tpu.dot_dimension_numbers<[1], [0], [0], [1], [0, 0, 1, 1], [], []>} : vector<8x25xbf16>, vector<25x256xbf16>, vector<8x256xf32> -> vector<8x256xf32>
    %c1 = arith.constant 1 : index
    %c0_4 = arith.constant 0 : index
    %c0_5 = arith.constant 0 : index
    %4 = vector.load %arg1[%c1, %c0_4, %c0_5] : memref<4x25x256xbf16, #tpu.memory_space<vmem>>, vector<1x25x256xbf16>
    %5 = vector.shape_cast %4 : vector<1x25x256xbf16> to vector<25x256xbf16>
    %cst_6 = arith.constant dense<0.000000e+00> : vector<8x256xf32>
    %6 = tpu.matmul %0, %5, %cst_6 {dimension_numbers = #tpu.dot_dimension_numbers<[1], [0], [0], [1], [0, 0, 1, 1], [], []>} : vector<8x25xbf16>, vector<25x256xbf16>, vector<8x256xf32> -> vector<8x256xf32>
    %7 = arith.maximumf %3, %6 : vector<8x256xf32>
    %c2 = arith.constant 2 : index
    %c0_7 = arith.constant 0 : index
    %c0_8 = arith.constant 0 : index
    %8 = vector.load %arg1[%c2, %c0_7, %c0_8] : memref<4x25x256xbf16, #tpu.memory_space<vmem>>, vector<1x25x256xbf16>
    %9 = vector.shape_cast %8 : vector<1x25x256xbf16> to vector<25x256xbf16>
    %cst_9 = arith.constant dense<0.000000e+00> : vector<8x256xf32>
    %10 = tpu.matmul %0, %9, %cst_9 {dimension_numbers = #tpu.dot_dimension_numbers<[1], [0], [0], [1], [0, 0, 1, 1], [], []>} : vector<8x25xbf16>, vector<25x256xbf16>, vector<8x256xf32> -> vector<8x256xf32>
    %11 = arith.maximumf %7, %10 : vector<8x256xf32>
    %c3 = arith.constant 3 : index
    %c0_10 = arith.constant 0 : index
    %c0_11 = arith.constant 0 : index
    %12 = vector.load %arg1[%c3, %c0_10, %c0_11] : memref<4x25x256xbf16, #tpu.memory_space<vmem>>, vector<1x25x256xbf16>
    %13 = vector.shape_cast %12 : vector<1x25x256xbf16> to vector<25x256xbf16>
    %cst_12 = arith.constant dense<0.000000e+00> : vector<8x256xf32>
    %14 = tpu.matmul %0, %13, %cst_12 {dimension_numbers = #tpu.dot_dimension_numbers<[1], [0], [0], [1], [0, 0, 1, 1], [], []>} : vector<8x25xbf16>, vector<25x256xbf16>, vector<8x256xf32> -> vector<8x256xf32>
    %15 = arith.maximumf %11, %14 : vector<8x256xf32>
    %c0_13 = arith.constant 0 : index
    %c0_14 = arith.constant 0 : index
    %16 = vector.load %arg3[%c0_13, %c0_14] : memref<8x1xf32, #tpu.memory_space<vmem>>, vector<8x1xf32>
    %17 = vector.broadcast %16 : vector<8x1xf32> to vector<8x256xf32>
    %18 = arith.addf %15, %17 : vector<8x256xf32>
    %cst_15 = arith.constant 0.000000e+00 : f32
    %19 = vector.broadcast %cst_15 : f32 to vector<8x256xf32>
    %20 = arith.maximumf %18, %19 : vector<8x256xf32>
    %21 = arith.truncf %20 : vector<8x256xf32> to vector<8x256xbf16>
    %c0_16 = arith.constant 0 : index
    %c0_17 = arith.constant 0 : index
    %22 = vector.load %arg4[%c0_16, %c0_17] : memref<8x256xbf16, #tpu.memory_space<vmem>>, vector<8x256xbf16>
    tpu.vector_store %arg4[%c0_16, %c0_17], %21 {strides = array<i32>} : memref<8x256xbf16, #tpu.memory_space<vmem>>, vector<8x256xbf16>,
    return
  }
  func.func @transform_0(%arg0: i32) -> (i32, i32, i32) {
    %c0_i32 = arith.constant 0 : i32
    %c0_i32_0 = arith.constant 0 : i32
    %c0_i32_1 = arith.constant 0 : i32
    return %c0_i32, %c0_i32_0, %arg0 : i32, i32, i32
  }
  func.func @transform_1(%arg0: i32) -> (i32, i32) {
    %c0_i32 = arith.constant 0 : i32
    %c0_i32_0 = arith.constant 0 : i32
    %c0_i32_1 = arith.constant 0 : i32
    return %c0_i32, %c0_i32_0 : i32, i32
  }
  func.func @transform_2(%arg0: i32) -> (i32, i32) {
    %c0_i32 = arith.constant 0 : i32
    %c0_i32_0 = arith.constant 0 : i32
    %c0_i32_1 = arith.constant 0 : i32
    return %c0_i32, %c0_i32_0 : i32, i32
  }
  func.func @transform_3(%arg0: i32) -> (i32, i32) {
    %c0_i32 = arith.constant 0 : i32
    %c0_i32_0 = arith.constant 0 : i32
    return %c0_i32, %arg0 : i32, i32
  }
}

module attributes {stable_mosaic.version = 11 : i64} {
  func.func @_conv_pool_kernel(%arg0: i32, %arg1: memref<4x200x128xbf16, #tpu.memory_space<vmem>>, %arg2: memref<16x200xbf16, #tpu.memory_space<vmem>>, %arg3: memref<16x1xf32, #tpu.memory_space<vmem>>, %arg4: memref<16x128xbf16, #tpu.memory_space<vmem>>) attributes {dimension_semantics = [#tpu.dimension_semantics<parallel>], iteration_bounds = array<i64: 1>, scalar_prefetch = 0 : i64, scratch_operands = 0 : i64, tpu.core_type = #tpu.core_type<tc>, window_params = [{transform_indices = @transform_0, window_bounds = array<i64: 4, 200, 128>}, {pipeline_mode = #tpu.pipeline_mode<synchronous>, transform_indices = @transform_1, window_bounds = array<i64: 16, 200>}, {pipeline_mode = #tpu.pipeline_mode<synchronous>, transform_indices = @transform_2, window_bounds = array<i64: 16, 1>}, {transform_indices = @transform_3, window_bounds = array<i64: 16, 128>}]} {
    %c0 = arith.constant 0 : index
    %c0_0 = arith.constant 0 : index
    %0 = vector.load %arg2[%c0, %c0_0] : memref<16x200xbf16, #tpu.memory_space<vmem>>, vector<16x200xbf16>
    %c0_1 = arith.constant 0 : index
    %c0_2 = arith.constant 0 : index
    %c0_3 = arith.constant 0 : index
    %1 = vector.load %arg1[%c0_1, %c0_2, %c0_3] : memref<4x200x128xbf16, #tpu.memory_space<vmem>>, vector<1x200x128xbf16>
    %2 = vector.shape_cast %1 : vector<1x200x128xbf16> to vector<200x128xbf16>
    %cst = arith.constant dense<0.000000e+00> : vector<16x128xf32>
    %3 = tpu.matmul %0, %2, %cst {dimension_numbers = #tpu.dot_dimension_numbers<[1], [0], [0], [1], [0, 0, 1, 1], [], []>} : vector<16x200xbf16>, vector<200x128xbf16>, vector<16x128xf32> -> vector<16x128xf32>
    %c1 = arith.constant 1 : index
    %c0_4 = arith.constant 0 : index
    %c0_5 = arith.constant 0 : index
    %4 = vector.load %arg1[%c1, %c0_4, %c0_5] : memref<4x200x128xbf16, #tpu.memory_space<vmem>>, vector<1x200x128xbf16>
    %5 = vector.shape_cast %4 : vector<1x200x128xbf16> to vector<200x128xbf16>
    %cst_6 = arith.constant dense<0.000000e+00> : vector<16x128xf32>
    %6 = tpu.matmul %0, %5, %cst_6 {dimension_numbers = #tpu.dot_dimension_numbers<[1], [0], [0], [1], [0, 0, 1, 1], [], []>} : vector<16x200xbf16>, vector<200x128xbf16>, vector<16x128xf32> -> vector<16x128xf32>
    %7 = arith.maximumf %3, %6 : vector<16x128xf32>
    %c2 = arith.constant 2 : index
    %c0_7 = arith.constant 0 : index
    %c0_8 = arith.constant 0 : index
    %8 = vector.load %arg1[%c2, %c0_7, %c0_8] : memref<4x200x128xbf16, #tpu.memory_space<vmem>>, vector<1x200x128xbf16>
    %9 = vector.shape_cast %8 : vector<1x200x128xbf16> to vector<200x128xbf16>
    %cst_9 = arith.constant dense<0.000000e+00> : vector<16x128xf32>
    %10 = tpu.matmul %0, %9, %cst_9 {dimension_numbers = #tpu.dot_dimension_numbers<[1], [0], [0], [1], [0, 0, 1, 1], [], []>} : vector<16x200xbf16>, vector<200x128xbf16>, vector<16x128xf32> -> vector<16x128xf32>
    %11 = arith.maximumf %7, %10 : vector<16x128xf32>
    %c3 = arith.constant 3 : index
    %c0_10 = arith.constant 0 : index
    %c0_11 = arith.constant 0 : index
    %12 = vector.load %arg1[%c3, %c0_10, %c0_11] : memref<4x200x128xbf16, #tpu.memory_space<vmem>>, vector<1x200x128xbf16>
    %13 = vector.shape_cast %12 : vector<1x200x128xbf16> to vector<200x128xbf16>
    %cst_12 = arith.constant dense<0.000000e+00> : vector<16x128xf32>
    %14 = tpu.matmul %0, %13, %cst_12 {dimension_numbers = #tpu.dot_dimension_numbers<[1], [0], [0], [1], [0, 0, 1, 1], [], []>} : vector<16x200xbf16>, vector<200x128xbf16>, vector<16x128xf32> -> vector<16x128xf32>
    %15 = arith.maximumf %11, %14 : vector<16x128xf32>
    %c0_13 = arith.constant 0 : index
    %c0_14 = arith.constant 0 : index
    %16 = vector.load %arg3[%c0_13, %c0_14] : memref<16x1xf32, #tpu.memory_space<vmem>>, vector<16x1xf32>
    %17 = vector.broadcast %16 : vector<16x1xf32> to vector<16x128xf32>
    %18 = arith.addf %15, %17 : vector<16x128xf32>
    %cst_15 = arith.constant 0.000000e+00 : f32
    %19 = vector.broadcast %cst_15 : f32 to vector<16x128xf32>
    %20 = arith.maximumf %18, %19 : vector<16x128xf32>
    %21 = arith.truncf %20 : vector<16x128xf32> to vector<16x128xbf16>
    %c0_16 = arith.constant 0 : index
    %c0_17 = arith.constant 0 : index
    %22 = vector.load %arg4[%c0_16, %c0_17] : memref<16x128xbf16, #tpu.memory_space<vmem>>, vector<16x128xbf16>
    tpu.vector_store %arg4[%c0_16, %c0_17], %21 {strides = array<i32>} : memref<16x128xbf16, #tpu.memory_space<vmem>>, vector<16x128xbf16>,
    return
  }
  func.func @transform_0(%arg0: i32) -> (i32, i32, i32) {
    %c0_i32 = arith.constant 0 : i32
    %c0_i32_0 = arith.constant 0 : i32
    %c0_i32_1 = arith.constant 0 : i32
    return %c0_i32, %c0_i32_0, %arg0 : i32, i32, i32
  }
  func.func @transform_1(%arg0: i32) -> (i32, i32) {
    %c0_i32 = arith.constant 0 : i32
    %c0_i32_0 = arith.constant 0 : i32
    %c0_i32_1 = arith.constant 0 : i32
    return %c0_i32, %c0_i32_0 : i32, i32
  }
  func.func @transform_2(%arg0: i32) -> (i32, i32) {
    %c0_i32 = arith.constant 0 : i32
    %c0_i32_0 = arith.constant 0 : i32
    %c0_i32_1 = arith.constant 0 : i32
    return %c0_i32, %c0_i32_0 : i32, i32
  }
  func.func @transform_3(%arg0: i32) -> (i32, i32) {
    %c0_i32 = arith.constant 0 : i32
    %c0_i32_0 = arith.constant 0 : i32
    return %c0_i32, %arg0 : i32, i32
  }
}

module attributes {stable_mosaic.version = 11 : i64} {
  func.func @_fc_fused_kernel(%arg0: i32, %arg1: memref<400x128xbf16, #tpu.memory_space<vmem>>, %arg2: memref<120x400xbf16, #tpu.memory_space<vmem>>, %arg3: memref<120x1xf32, #tpu.memory_space<vmem>>, %arg4: memref<84x120xbf16, #tpu.memory_space<vmem>>, %arg5: memref<84x1xf32, #tpu.memory_space<vmem>>, %arg6: memref<16x84xbf16, #tpu.memory_space<vmem>>, %arg7: memref<16x1xf32, #tpu.memory_space<vmem>>, %arg8: memref<16x128xf32, #tpu.memory_space<vmem>>) attributes {dimension_semantics = [#tpu.dimension_semantics<parallel>], iteration_bounds = array<i64: 1>, scalar_prefetch = 0 : i64, scratch_operands = 0 : i64, tpu.core_type = #tpu.core_type<tc>, window_params = [{transform_indices = @transform_0, window_bounds = array<i64: 400, 128>}, {pipeline_mode = #tpu.pipeline_mode<synchronous>, transform_indices = @transform_1, window_bounds = array<i64: 120, 400>}, {pipeline_mode = #tpu.pipeline_mode<synchronous>, transform_indices = @transform_2, window_bounds = array<i64: 120, 1>}, {pipeline_mode = #tpu.pipeline_mode<synchronous>, transform_indices = @transform_3, window_bounds = array<i64: 84, 120>}, {pipeline_mode = #tpu.pipeline_mode<synchronous>, transform_indices = @transform_4, window_bounds = array<i64: 84, 1>}, {pipeline_mode = #tpu.pipeline_mode<synchronous>, transform_indices = @transform_5, window_bounds = array<i64: 16, 84>}, {pipeline_mode = #tpu.pipeline_mode<synchronous>, transform_indices = @transform_6, window_bounds = array<i64: 16, 1>}, {transform_indices = @transform_7, window_bounds = array<i64: 16, 128>}]} {
    %c0 = arith.constant 0 : index
    %c0_0 = arith.constant 0 : index
    %0 = vector.load %arg2[%c0, %c0_0] : memref<120x400xbf16, #tpu.memory_space<vmem>>, vector<120x400xbf16>
    %c0_1 = arith.constant 0 : index
    %c0_2 = arith.constant 0 : index
    %1 = vector.load %arg1[%c0_1, %c0_2] : memref<400x128xbf16, #tpu.memory_space<vmem>>, vector<400x128xbf16>
    %cst = arith.constant dense<0.000000e+00> : vector<120x128xf32>
    %2 = tpu.matmul %0, %1, %cst {dimension_numbers = #tpu.dot_dimension_numbers<[1], [0], [0], [1], [0, 0, 1, 1], [], []>} : vector<120x400xbf16>, vector<400x128xbf16>, vector<120x128xf32> -> vector<120x128xf32>
    %c0_3 = arith.constant 0 : index
    %c0_4 = arith.constant 0 : index
    %3 = vector.load %arg3[%c0_3, %c0_4] : memref<120x1xf32, #tpu.memory_space<vmem>>, vector<120x1xf32>
    %4 = vector.broadcast %3 : vector<120x1xf32> to vector<120x128xf32>
    %5 = arith.addf %2, %4 : vector<120x128xf32>
    %cst_5 = arith.constant 0.000000e+00 : f32
    %6 = vector.broadcast %cst_5 : f32 to vector<120x128xf32>
    %7 = arith.maximumf %5, %6 : vector<120x128xf32>
    %8 = arith.truncf %7 : vector<120x128xf32> to vector<120x128xbf16>
    %c0_6 = arith.constant 0 : index
    %c0_7 = arith.constant 0 : index
    %9 = vector.load %arg4[%c0_6, %c0_7] : memref<84x120xbf16, #tpu.memory_space<vmem>>, vector<84x120xbf16>
    %cst_8 = arith.constant dense<0.000000e+00> : vector<84x128xf32>
    %10 = tpu.matmul %9, %8, %cst_8 {dimension_numbers = #tpu.dot_dimension_numbers<[1], [0], [0], [1], [0, 0, 1, 1], [], []>} : vector<84x120xbf16>, vector<120x128xbf16>, vector<84x128xf32> -> vector<84x128xf32>
    %c0_9 = arith.constant 0 : index
    %c0_10 = arith.constant 0 : index
    %11 = vector.load %arg5[%c0_9, %c0_10] : memref<84x1xf32, #tpu.memory_space<vmem>>, vector<84x1xf32>
    %12 = vector.broadcast %11 : vector<84x1xf32> to vector<84x128xf32>
    %13 = arith.addf %10, %12 : vector<84x128xf32>
    %cst_11 = arith.constant 0.000000e+00 : f32
    %14 = vector.broadcast %cst_11 : f32 to vector<84x128xf32>
    %15 = arith.maximumf %13, %14 : vector<84x128xf32>
    %16 = arith.truncf %15 : vector<84x128xf32> to vector<84x128xbf16>
    %c0_12 = arith.constant 0 : index
    %c0_13 = arith.constant 0 : index
    %17 = vector.load %arg6[%c0_12, %c0_13] : memref<16x84xbf16, #tpu.memory_space<vmem>>, vector<16x84xbf16>
    %cst_14 = arith.constant dense<0.000000e+00> : vector<16x128xf32>
    %18 = tpu.matmul %17, %16, %cst_14 {dimension_numbers = #tpu.dot_dimension_numbers<[1], [0], [0], [1], [0, 0, 1, 1], [], []>} : vector<16x84xbf16>, vector<84x128xbf16>, vector<16x128xf32> -> vector<16x128xf32>
    %c0_15 = arith.constant 0 : index
    %c0_16 = arith.constant 0 : index
    %19 = vector.load %arg7[%c0_15, %c0_16] : memref<16x1xf32, #tpu.memory_space<vmem>>, vector<16x1xf32>
    %20 = vector.broadcast %19 : vector<16x1xf32> to vector<16x128xf32>
    %21 = arith.addf %18, %20 : vector<16x128xf32>
    %c0_17 = arith.constant 0 : index
    %c0_18 = arith.constant 0 : index
    %22 = vector.load %arg8[%c0_17, %c0_18] : memref<16x128xf32, #tpu.memory_space<vmem>>, vector<16x128xf32>
    tpu.vector_store %arg8[%c0_17, %c0_18], %21 {strides = array<i32>} : memref<16x128xf32, #tpu.memory_space<vmem>>, vector<16x128xf32>,
    return
  }
  func.func @transform_0(%arg0: i32) -> (i32, i32) {
    %c0_i32 = arith.constant 0 : i32
    %c0_i32_0 = arith.constant 0 : i32
    return %c0_i32, %arg0 : i32, i32
  }
  func.func @transform_1(%arg0: i32) -> (i32, i32) {
    %c0_i32 = arith.constant 0 : i32
    %c0_i32_0 = arith.constant 0 : i32
    %c0_i32_1 = arith.constant 0 : i32
    return %c0_i32, %c0_i32_0 : i32, i32
  }
  func.func @transform_2(%arg0: i32) -> (i32, i32) {
    %c0_i32 = arith.constant 0 : i32
    %c0_i32_0 = arith.constant 0 : i32
    %c0_i32_1 = arith.constant 0 : i32
    return %c0_i32, %c0_i32_0 : i32, i32
  }
  func.func @transform_3(%arg0: i32) -> (i32, i32) {
    %c0_i32 = arith.constant 0 : i32
    %c0_i32_0 = arith.constant 0 : i32
    %c0_i32_1 = arith.constant 0 : i32
    return %c0_i32, %c0_i32_0 : i32, i32
  }
  func.func @transform_4(%arg0: i32) -> (i32, i32) {
    %c0_i32 = arith.constant 0 : i32
    %c0_i32_0 = arith.constant 0 : i32
    %c0_i32_1 = arith.constant 0 : i32
    return %c0_i32, %c0_i32_0 : i32, i32
  }
  func.func @transform_5(%arg0: i32) -> (i32, i32) {
    %c0_i32 = arith.constant 0 : i32
    %c0_i32_0 = arith.constant 0 : i32
    %c0_i32_1 = arith.constant 0 : i32
    return %c0_i32, %c0_i32_0 : i32, i32
  }
  func.func @transform_6(%arg0: i32) -> (i32, i32) {
    %c0_i32 = arith.constant 0 : i32
    %c0_i32_0 = arith.constant 0 : i32
    %c0_i32_1 = arith.constant 0 : i32
    return %c0_i32, %c0_i32_0 : i32, i32
  }
  func.func @transform_7(%arg0: i32) -> (i32, i32) {
    %c0_i32 = arith.constant 0 : i32
    %c0_i32_0 = arith.constant 0 : i32
    return %c0_i32, %arg0 : i32, i32
  }
}

</mosaic_0001>

<llo_original>
// kernel: cnn_forward.3
$region0: #{cnn_forward.3}
  #allocation0 [shape = 'u32[]', space=smem, size = 0x4, offset = 0x4, fixed_abs, tag = 'smem constant byte address 0x4 - core index']
  #allocation1 [shape = 'u32[144,128]{1,0:T(1,128)}', space=vmem, size = 0x12000, scoped, tag = 'internal scratch']
  %s0 = inlined_call_operand.vmem [shape: bf16[4,25,512], index: 0, kind: input, shape index: {}]
  %s1 = inlined_call_operand.vmem [shape: bf16[8,25], index: 1, kind: input, shape index: {}]
  %s2 = inlined_call_operand.vmem [shape: f32[8,1], index: 2, kind: input, shape index: {}]
  %s3 = inlined_call_operand.vmem [shape: bf16[8,512], index: 3, kind: output, shape index: {}]
  %s4 = sld [smem:[#allocation0]]
  $region83: #{cnn_forward.3} parent=0
    _
  %s6 = ssub.s32 1, %s4
  %s7 = scalar_select 0, %s6, %s4
  $region1: #{cnn_forward.3} parent=0
    #allocation2 [shape = 'u8[131072]{0}', space=vmem, size = 0x20000, scoped, tag = 'input window, operand 0']
    loop: start=0, step=1, limit=4
    $region2: #{cnn_forward.3} parent=1 // loop_pre_header
      _
    $region3: #{cnn_forward.3} parent=1 // loop_header
      %s9 = sphi 0, %s13
      %p10 = scmp.ge.s32.totalorder %s9, 4
      %s19 = sphi 0, %s21
      %s22 = sphi 0, %s19
      %s23 = sphi 0, %s22
      %s39 = sphi 0, %s23
      %s43 = sphi 0, %s43
      %s45 = sphi 0, %s43
      %s46 = sphi 0, %s45
      %s60 = sphi 0, %s46
      %s64 = sphi 0, %s64
      %s66 = sphi 0, %s64
      %s67 = sphi 0, %s66
      %s81 = sphi 0, %s67
      %s87 = sphi 0, %s89
      %s90 = sphi 0, %s87
      %s91 = sphi 0, %s90
      %s107 = sphi 0, %s91
    $region4: #{cnn_forward.3} parent=1 // loop_header_branch
      %12 = sbr.rel (%p10) target = $region8
    $region5: #{cnn_forward.3} parent=1 // loop_body
      %s14 = ssub.s32 %s9, 1
      %s15 = ssub.s32 %s9, 2
      %s16 = sadd.s32 %s9, 1
      %s17 = ssub.s32 %s9, %s16
      %p18 = scmp.eq.s32.totalorder %s17, 0
      %s20 = sadd.s32 %s19, 1
      %s21 = scalar_select %p18, %s19, %s20
      %p24 = pneg %p18
      %p25 = scmp.eq.s32.totalorder %s9, 1
      %p26 = por %p24, %p25
      %p27 = scmp.ne.s32.totalorder %s19, %s22
      %p28 = scmp.eq.s32.totalorder %s9, 0
      %p29 = por %p27, %p28
      %p30 = scmp.ne.s32.totalorder %s19, %s22
      %p31 = scmp.eq.s32.totalorder %s14, 1
      %p32 = por %p30, %p31
      %p33 = scmp.ne.s32.totalorder %s22, %s23
      %p34 = scmp.eq.s32.totalorder %s14, 0
      %p35 = por %p33, %p34
      %p36 = scmp.ne.s32.totalorder %s22, %s23
      %p37 = scmp.eq.s32.totalorder %s15, 1
      %p38 = por %p36, %p37
      %p40 = scmp.ne.s32.totalorder %s23, %s39
      %p41 = scmp.eq.s32.totalorder %s15, 0
      %p42 = por %p40, %p41
      %s44 = sadd.s32 %s43, 1
      %p47 = scmp.eq.s32.totalorder %s9, 1
      %p48 = scmp.ne.s32.totalorder %s43, %s45
      %p49 = scmp.eq.s32.totalorder %s9, 0
      %p50 = por %p48, %p49
      %p51 = scmp.ne.s32.totalorder %s43, %s45
      %p52 = scmp.eq.s32.totalorder %s14, 1
      %p53 = por %p51, %p52
      %p54 = scmp.ne.s32.totalorder %s45, %s46
      %p55 = scmp.eq.s32.totalorder %s14, 0
      %p56 = por %p54, %p55
      %p57 = scmp.ne.s32.totalorder %s45, %s46
      %p58 = scmp.eq.s32.totalorder %s15, 1
      %p59 = por %p57, %p58
      %p61 = scmp.ne.s32.totalorder %s46, %s60
      %p62 = scmp.eq.s32.totalorder %s15, 0
      %p63 = por %p61, %p62
      %s65 = sadd.s32 %s64, 1
      %p68 = scmp.eq.s32.totalorder %s9, 1
      %p69 = scmp.ne.s32.totalorder %s64, %s66
      %p70 = scmp.eq.s32.totalorder %s9, 0
      %p71 = por %p69, %p70
      %p72 = scmp.ne.s32.totalorder %s64, %s66
      %p73 = scmp.eq.s32.totalorder %s14, 1
      %p74 = por %p72, %p73
      %p75 = scmp.ne.s32.totalorder %s66, %s67
      %p76 = scmp.eq.s32.totalorder %s14, 0
      %p77 = por %p75, %p76
      %p78 = scmp.ne.s32.totalorder %s66, %s67
      %p79 = scmp.eq.s32.totalorder %s15, 1
      %p80 = por %p78, %p79
      %p82 = scmp.ne.s32.totalorder %s67, %s81
      %p83 = scmp.eq.s32.totalorder %s15, 0
      %p84 = por %p82, %p83
      %s85 = ssub.s32 %s9, %s16
      %p86 = scmp.eq.s32.totalorder %s85, 0
      %s88 = sadd.s32 %s87, 1
      %s89 = scalar_select %p86, %s87, %s88
      %p92 = pneg %p86
      %p93 = scmp.eq.s32.totalorder %s9, 1
      %p94 = por %p92, %p93
      %p95 = scmp.ne.s32.totalorder %s87, %s90
      %p96 = scmp.eq.s32.totalorder %s9, 0
      %p97 = por %p95, %p96
      %p98 = scmp.ne.s32.totalorder %s87, %s90
      %p99 = scmp.eq.s32.totalorder %s14, 1
      %p100 = por %p98, %p99
      %p101 = scmp.ne.s32.totalorder %s90, %s91
      %p102 = scmp.eq.s32.totalorder %s14, 0
      %p103 = por %p101, %p102
      %p104 = scmp.ne.s32.totalorder %s90, %s91
      %p105 = scmp.eq.s32.totalorder %s15, 1
      %p106 = por %p104, %p105
      %p108 = scmp.ne.s32.totalorder %s91, %s107
      %p109 = scmp.eq.s32.totalorder %s15, 0
      %p110 = por %p108, %p109
      %p111 = scmp.le.s32.totalorder 1, %s9
      %p112 = scmp.lt.s32.totalorder %s9, 3
      %p113 = pnand %p111, %p112
      %p114 = pneg %p113
      // Predicated region
      $region9: #{cnn_forward.3} parent=5 // pred_check
        _
      $region10: #{cnn_forward.3} parent=5 // pred_check_branch
        %116 = sbr.rel (%p113) target = $region12
      $region11: #{cnn_forward.3} parent=5 // pred_region
        %s117 = ssub.s32 %s9, 1
        // Predicated region
        $region13: #{cnn_forward.3} parent=11 // pred_check
          %p118 = pneg %p56
        $region14: #{cnn_forward.3} parent=11 // pred_check_branch
          %120 = sbr.rel (%p118) target = $region16
        $region15: #{cnn_forward.3} parent=11 // pred_region
          _
        $region16: #{cnn_forward.3} parent=11 // pred_fallthru
          _
        // Predicated region
        $region17: #{cnn_forward.3} parent=11 // pred_check
          %p121 = pneg %p77
        $region18: #{cnn_forward.3} parent=11 // pred_check_branch
          %123 = sbr.rel (%p121) target = $region20
        $region19: #{cnn_forward.3} parent=11 // pred_region
          _
        $region20: #{cnn_forward.3} parent=11 // pred_fallthru
          _
      $region12: #{cnn_forward.3} parent=5 // pred_fallthru
        _
      %p124 = scmp.lt.s32.totalorder %s9, 2
      // Predicated region
      $region21: #{cnn_forward.3} parent=5 // pred_check
        %p125 = pneg %p124
      $region22: #{cnn_forward.3} parent=5 // pred_check_branch
        %127 = sbr.rel (%p125) target = $region24
      $region23: #{cnn_forward.3} parent=5 // pred_region
        // Predicated region
        $region25: #{cnn_forward.3} parent=23 // pred_check
          %p128 = pneg %p29
        $region26: #{cnn_forward.3} parent=23 // pred_check_branch
          %130 = sbr.rel (%p128) target = $region28
        $region27: #{cnn_forward.3} parent=23 // pred_region
          %s131 = sand.u32 %s19, 1
          %s132 = sand.u32 %s19, 1
          %s133 = smul.addr %s132, 128
          %s134 = scalar_lea.vmem [#allocation2], %s133
          %s135 = smul.u32 2, %s9
          %s136 = smul.addr %s135, 4
          %s137 = scalar_lea.vmem %s0, %s136
          // Predicated region
          $region29: #{cnn_forward.3} parent=27 // pred_check
            _
          $region30: #{cnn_forward.3} parent=27 // pred_check_branch
            %139 = sbr.rel (0) target = $region32
          $region31: #{cnn_forward.3} parent=27 // pred_region
            // Predicated region
            $region33: #{cnn_forward.3} parent=31 // pred_check
              _
            $region34: #{cnn_forward.3} parent=31 // pred_check_branch
              %141 = sbr.rel (0) target = $region36
            $region35: #{cnn_forward.3} parent=31 // pred_region
              // Predicated region
              $region48: #{cnn_forward.3} parent=35 // pred_check
                _
              $region49: #{cnn_forward.3} parent=35 // pred_check_branch
                %186 = sbr.rel (0) target = $region51
              $region50: #{cnn_forward.3} parent=35 // pred_region
                loop: start=0, step=1, limit=1
                $region52: #{cnn_forward.3} parent=50 // loop_pre_header
                  _
                $region53: #{cnn_forward.3} parent=50 // loop_header
                  %s188 = sphi 0, %s192
                  %p189 = scmp.ge.s32.totalorder %s188, 1
                  %s193 = sphi %s137, %s137
                  %s194 = sphi %s134, %s134
                $region54: #{cnn_forward.3} parent=50 // loop_header_branch
                  %191 = sbr.rel (%p189) target = $region58
                $region55: #{cnn_forward.3} parent=50 // loop_body
                  %v195 = vld [vmem:[%s193] sm:$0xff]
                  %196 = vst [vmem:[%s194] sm:$0xff] %v195
                  %v197 = vld [vmem:[%s193 + $0x10] sm:$0xff]
                  %198 = vst [vmem:[%s194 + $0x8] sm:$0xff] %v197
                  %v199 = vld [vmem:[%s193 + $0x20] sm:$0xff]
                  %200 = vst [vmem:[%s194 + $0x10] sm:$0xff] %v199
                  %v201 = vld [vmem:[%s193 + $0x30] sm:$0xff]
                  %202 = vst [vmem:[%s194 + $0x18] sm:$0xff] %v201
                  %v203 = vld [vmem:[%s193 + $0x40] sm:$0xff]
                  %204 = vst [vmem:[%s194 + $0x20] sm:$0xff] %v203
                  %v205 = vld [vmem:[%s193 + $0x50] sm:$0xff]
                  %206 = vst [vmem:[%s194 + $0x28] sm:$0xff] %v205
                  %v207 = vld [vmem:[%s193 + $0x60] sm:$0xff]
                  %208 = vst [vmem:[%s194 + $0x30] sm:$0xff] %v207
                  %v209 = vld [vmem:[%s193 + $0x70] sm:$0xff]
                  %210 = vst [vmem:[%s194 + $0x38] sm:$0xff] %v209
                  %v211 = vld [vmem:[%s193 + $0x80] sm:$0xff]
                  %212 = vst [vmem:[%s194 + $0x40] sm:$0xff] %v211
                  %v213 = vld [vmem:[%s193 + $0x90] sm:$0xff]
                  %214 = vst [vmem:[%s194 + $0x48] sm:$0xff] %v213
                  %v215 = vld [vmem:[%s193 + $0xa0] sm:$0xff]
                  %216 = vst [vmem:[%s194 + $0x50] sm:$0xff] %v215
                  %v217 = vld [vmem:[%s193 + $0xb0] sm:$0xff]
                  %218 = vst [vmem:[%s194 + $0x58] sm:$0xff] %v217
                  %v219 = vld [vmem:[%s193 + $0xc0] sm:$0xff]
                  %220 = vst [vmem:[%s194 + $0x60] sm:$0xff] %v219
                  %v221 = vld [vmem:[%s193 + $0xd0] sm:$0xff]
                  %222 = vst [vmem:[%s194 + $0x68] sm:$0xff] %v221
                  %v223 = vld [vmem:[%s193 + $0xe0] sm:$0xff]
                  %224 = vst [vmem:[%s194 + $0x70] sm:$0xff] %v223
                  %v225 = vld [vmem:[%s193 + $0xf0] sm:$0xff]
                  %226 = vst [vmem:[%s194 + $0x78] sm:$0xff] %v225
                $region56: #{cnn_forward.3} parent=50 // loop_footer
                  %s192 = sadd.s32 1, %s188
                $region57: #{cnn_forward.3} parent=50 // loop_footer_branch
                  %187 = sbr.rel target = $region53
                $region58: #{cnn_forward.3} parent=50 // loop_exit
                  _
              $region51: #{cnn_forward.3} parent=35 // pred_fallthru
                _
              // Predicated region
              $region59: #{cnn_forward.3} parent=35 // pred_check
                _
              $region60: #{cnn_forward.3} parent=35 // pred_check_branch
                %228 = sbr.rel target = $region62
              $region61: #{cnn_forward.3} parent=35 // pred_region
                _
              $region62: #{cnn_forward.3} parent=35 // pred_fallthru
                _
            $region36: #{cnn_forward.3} parent=31 // pred_fallthru
              _
            // Predicated region
            $region37: #{cnn_forward.3} parent=31 // pred_check
              _
            $region38: #{cnn_forward.3} parent=31 // pred_check_branch
              %143 = sbr.rel target = $region40
            $region39: #{cnn_forward.3} parent=31 // pred_region
              loop: start=0, step=1, limit=1
              $region41: #{cnn_forward.3} parent=39 // loop_pre_header
                _
              $region42: #{cnn_forward.3} parent=39 // loop_header
                %s146 = sphi 0, %s150
                %p147 = scmp.ge.s32.totalorder %s146, 1
                %s151 = sphi %s137, %s137
                %s152 = sphi %s134, %s134
              $region43: #{cnn_forward.3} parent=39 // loop_header_branch
                %149 = sbr.rel (%p147) target = $region47
              $region44: #{cnn_forward.3} parent=39 // loop_body
                %v153 = vld [vmem:[%s151] sm:$0xff]
                %154 = vst [vmem:[%s152] sm:$0xff] %v153
                %v155 = vld [vmem:[%s151 + $0x10] sm:$0xff]
                %156 = vst [vmem:[%s152 + $0x8] sm:$0xff] %v155
                %v157 = vld [vmem:[%s151 + $0x20] sm:$0xff]
                %158 = vst [vmem:[%s152 + $0x10] sm:$0xff] %v157
                %v159 = vld [vmem:[%s151 + $0x30] sm:$0xff]
                %160 = vst [vmem:[%s152 + $0x18] sm:$0xff] %v159
                %v161 = vld [vmem:[%s151 + $0x40] sm:$0xff]
                %162 = vst [vmem:[%s152 + $0x20] sm:$0xff] %v161
                %v163 = vld [vmem:[%s151 + $0x50] sm:$0xff]
                %164 = vst [vmem:[%s152 + $0x28] sm:$0xff] %v163
                %v165 = vld [vmem:[%s151 + $0x60] sm:$0xff]
                %166 = vst [vmem:[%s152 + $0x30] sm:$0xff] %v165
                %v167 = vld [vmem:[%s151 + $0x70] sm:$0xff]
                %168 = vst [vmem:[%s152 + $0x38] sm:$0xff] %v167
                %v169 = vld [vmem:[%s151 + $0x80] sm:$0xff]
                %170 = vst [vmem:[%s152 + $0x40] sm:$0xff] %v169
                %v171 = vld [vmem:[%s151 + $0x90] sm:$0xff]
                %172 = vst [vmem:[%s152 + $0x48] sm:$0xff] %v171
                %v173 = vld [vmem:[%s151 + $0xa0] sm:$0xff]
                %174 = vst [vmem:[%s152 + $0x50] sm:$0xff] %v173
                %v175 = vld [vmem:[%s151 + $0xb0] sm:$0xff]
                %176 = vst [vmem:[%s152 + $0x58] sm:$0xff] %v175
                %v177 = vld [vmem:[%s151 + $0xc0] sm:$0xff]
                %178 = vst [vmem:[%s152 + $0x60] sm:$0xff] %v177
                %v179 = vld [vmem:[%s151 + $0xd0] sm:$0xff]
                %180 = vst [vmem:[%s152 + $0x68] sm:$0xff] %v179
                %v181 = vld [vmem:[%s151 + $0xe0] sm:$0xff]
                %182 = vst [vmem:[%s152 + $0x70] sm:$0xff] %v181
                %v183 = vld [vmem:[%s151 + $0xf0] sm:$0xff]
                %184 = vst [vmem:[%s152 + $0x78] sm:$0xff] %v183
              $region45: #{cnn_forward.3} parent=39 // loop_footer
                %s150 = sadd.s32 1, %s146
              $region46: #{cnn_forward.3} parent=39 // loop_footer_branch
                %145 = sbr.rel target = $region42
              $region47: #{cnn_forward.3} parent=39 // loop_exit
                _
            $region40: #{cnn_forward.3} parent=31 // pred_fallthru
              _
          $region32: #{cnn_forward.3} parent=27 // pred_fallthru
            _
          %229 = vnop
        $region28: #{cnn_forward.3} parent=23 // pred_fallthru
          _
      $region24: #{cnn_forward.3} parent=5 // pred_fallthru
        _
      %p230 = scmp.le.s32.totalorder 1, %s9
      %p231 = scmp.lt.s32.totalorder %s9, 3
      %p232 = pnand %p230, %p231
      %p233 = pneg %p232
      // Predicated region
      $region63: #{cnn_forward.3} parent=5 // pred_check
        _
      $region64: #{cnn_forward.3} parent=5 // pred_check_branch
        %235 = sbr.rel (%p232) target = $region66
      $region65: #{cnn_forward.3} parent=5 // pred_region
        %s236 = ssub.s32 %s9, 1
        %s237 = sand.u32 %s22, 1
        %s238 = sand.u32 %s22, 1
        %s239 = smul.addr %s238, 128
        %s240 = scalar_lea.vmem [#allocation2], %s239
        // Predicated region
        $region67: #{cnn_forward.3} parent=65 // pred_check
          %p241 = pneg %p35
        $region68: #{cnn_forward.3} parent=65 // pred_check_branch
          %243 = sbr.rel (%p241) target = $region70
        $region69: #{cnn_forward.3} parent=65 // pred_region
          _
        $region70: #{cnn_forward.3} parent=65 // pred_fallthru
          _
        %s244 = sand.u32 %s22, 1
        %s245 = sand.u32 %s22, 1
        %s246 = smul.addr %s245, 128
        %s247 = scalar_lea.vmem [#allocation2], %s246
        %p248 = pneg %p35
        %p249 = pneg %p32
        %p250 = pneg %p56
        %p251 = pneg %p53
        %p252 = pneg %p77
        %p253 = pneg %p74
        %p254 = pneg %p103
        %p255 = pneg %p100
        %s256 = smul.u32 2, %s14
        %p257 = scmp.lt.s32.totalorder %s256, 3
        %s258 = scalar_select %p257, %s256, 3
        %s259 = smul.addr %s258, 4
        %s260 = scalar_lea.vmem %s3, %s259
        %s261 = smul.u32 2, %s14
        %s262 = smul.u32 2, %s14
        %p263 = scmp.lt.s32.totalorder %s262, 3
        %s264 = scalar_select %p263, %s262, 3
        %s265 = smul.addr %s264, 4
        %s266 = scalar_lea.vmem %s3, %s265
        %s267 = smul.u32 2, %s14
        %v269 = vld [vmem:[%s1] sm:$0xf]
        %v270 = vld [vmem:[%s240] sm:$0xff]
        %v271 = vld [vmem:[%s240 + $0x8] sm:$0xff]
        %v272 = vld [vmem:[%s240 + $0x10] sm:$0xff]
        %v273 = vld [vmem:[%s240 + $0x18] sm:$0x11]
        %v278 = vunpack.c.l.b16 %v270
        %v279 = vunpack.c.h.b16 %v270
        %v280 = vunpack.c.l.b16 %v271
        %v281 = vunpack.c.h.b16 %v271
        %v282 = vunpack.c.l.b16 %v272
        %v283 = vunpack.c.h.b16 %v272
        %v284 = vunpack.c.l.b16 %v273
        %v285 = vunpack.c.h.b16 %v273
        %v286 = vpack.c.b16 %v280, %v278
        %v287 = vpack.c.b16 %v281, %v279
        %v288 = vpack.c.b16 %v284, %v282
        %v289 = vpack.c.b16 %v285, %v283
        %vm292 = vcmask 203776
        %v294 = vsel %vm292, %v269, 0
        %vm296 = vcmask 1043456
        %vm297 = vcmask 1044480
        %v298 = vsel %vm296, 4294967295, 65535
        %v299 = vsel %vm297, %v298, 0
        %v301 = vand.u32 %v288, %v299
        %v304 = vand.u32 %v289, %v299
        %306 = vmatprep.subr.bf16.mxu0 %v287
        %307 = vmatpush1.bf16.msra.mxu0 %v286
        %308 = vmatprep.subr.bf16.mxu0 %v304
        %309 = vmatpush1.bf16.msra.mxu0 %v301
        %310 = vmatprep.subr.bf16.mxu0 0
        %311 = vmatpush1.bf16.msra.mxu0 0
        %312 = vmatprep.subr.bf16.mxu0 0
        %313 = vmatpush1.bf16.msra.mxu0 0
        %314 = vmatprep.subr.bf16.mxu0 0
        %315 = vmatpush1.bf16.msra.mxu0 0
        %316 = vmatprep.subr.bf16.mxu0 0
        %317 = vmatpush1.bf16.msra.mxu0 0
        %318 = vmatprep.subr.bf16.mxu0 0
        %319 = vmatpush1.bf16.msra.mxu0 0
        %320 = vmatprep.subr.bf16.mxu0 0
        %321 = vmatpush1.bf16.msra.mxu0 0
        %322 = vmatprep.subr.bf16.mxu0 0
        %323 = vmatpush1.bf16.msra.mxu0 0
        %324 = vmatprep.subr.bf16.mxu0 0
        %325 = vmatpush1.bf16.msra.mxu0 0
        %326 = vmatprep.subr.bf16.mxu0 0
        %327 = vmatpush1.bf16.msra.mxu0 0
        %328 = vmatprep.subr.bf16.mxu0 0
        %329 = vmatpush1.bf16.msra.mxu0 0
        %330 = vmatprep.subr.bf16.mxu0 0
        %331 = vmatpush1.bf16.msra.mxu0 0
        %332 = vmatprep.subr.bf16.mxu0 0
        %333 = vmatpush1.bf16.msra.mxu0 0
        %334 = vmatprep.subr.bf16.mxu0 0
        %335 = vmatpush1.bf16.msra.mxu0 0
        %336 = vmatprep.subr.bf16.mxu0 0
        %337 = vmatpush1.bf16.msra.mxu0 0
        %338 = vmatprep.mubr.bf16.mxu0 0
        %339 = vmatmul.mubr.bf16.gmra.mrb[0].mxu0 %v294
        %v340 = vpop.f32.mrb[0].mxu0
        %v341 = vadd.f32 0.0, %v340
        %v342 = vpop.f32.mrb[0].mxu0
        %v343 = vadd.f32 0.0, %v342
        %v344 = vpop.f32.mrb[0].mxu0
        %v345 = vpop.f32.mrb[0].mxu0
        %346 = vdwg.mxu0
        %s347 = scalar_lea.vmem %s240, 32 [#allocation2]
        %v348 = vld [vmem:[%s347] sm:$0xff]
        %v349 = vld [vmem:[%s347 + $0x8] sm:$0xff]
        %v350 = vld [vmem:[%s347 + $0x10] sm:$0xff]
        %v351 = vld [vmem:[%s347 + $0x18] sm:$0x11]
        %v356 = vunpack.c.l.b16 %v348
        %v357 = vunpack.c.h.b16 %v348
        %v358 = vunpack.c.l.b16 %v349
        %v359 = vunpack.c.h.b16 %v349
        %v360 = vunpack.c.l.b16 %v350
        %v361 = vunpack.c.h.b16 %v350
        %v362 = vunpack.c.l.b16 %v351
        %v363 = vunpack.c.h.b16 %v351
        %v364 = vpack.c.b16 %v358, %v356
        %v365 = vpack.c.b16 %v359, %v357
        %v366 = vpack.c.b16 %v362, %v360
        %v367 = vpack.c.b16 %v363, %v361
        %v371 = vand.u32 %v366, %v299
        %v374 = vand.u32 %v367, %v299
        %376 = vmatprep.subr.bf16.mxu0 %v365
        %377 = vmatpush1.bf16.msra.mxu0 %v364
        %378 = vmatprep.subr.bf16.mxu0 %v374
        %379 = vmatpush1.bf16.msra.mxu0 %v371
        %380 = vmatprep.subr.bf16.mxu0 0
        %381 = vmatpush1.bf16.msra.mxu0 0
        %382 = vmatprep.subr.bf16.mxu0 0
        %383 = vmatpush1.bf16.msra.mxu0 0
        %384 = vmatprep.subr.bf16.mxu0 0
        %385 = vmatpush1.bf16.msra.mxu0 0
        %386 = vmatprep.subr.bf16.mxu0 0
        %387 = vmatpush1.bf16.msra.mxu0 0
        %388 = vmatprep.subr.bf16.mxu0 0
        %389 = vmatpush1.bf16.msra.mxu0 0
        %390 = vmatprep.subr.bf16.mxu0 0
        %391 = vmatpush1.bf16.msra.mxu0 0
        %392 = vmatprep.subr.bf16.mxu0 0
        %393 = vmatpush1.bf16.msra.mxu0 0
        %394 = vmatprep.subr.bf16.mxu0 0
        %395 = vmatpush1.bf16.msra.mxu0 0
        %396 = vmatprep.subr.bf16.mxu0 0
        %397 = vmatpush1.bf16.msra.mxu0 0
        %398 = vmatprep.subr.bf16.mxu0 0
        %399 = vmatpush1.bf16.msra.mxu0 0
        %400 = vmatprep.subr.bf16.mxu0 0
        %401 = vmatpush1.bf16.msra.mxu0 0
        %402 = vmatprep.subr.bf16.mxu0 0
        %403 = vmatpush1.bf16.msra.mxu0 0
        %404 = vmatprep.subr.bf16.mxu0 0
        %405 = vmatpush1.bf16.msra.mxu0 0
        %406 = vmatprep.subr.bf16.mxu0 0
        %407 = vmatpush1.bf16.msra.mxu0 0
        %408 = vmatprep.mubr.bf16.mxu0 0
        %409 = vmatmul.mubr.bf16.gmra.mrb[0].mxu0 %v294
        %v410 = vpop.f32.mrb[0].mxu0
        %v411 = vadd.f32 0.0, %v410
        %v412 = vpop.f32.mrb[0].mxu0
        %v413 = vadd.f32 0.0, %v412
        %v414 = vpop.f32.mrb[0].mxu0
        %v415 = vpop.f32.mrb[0].mxu0
        %416 = vdwg.mxu0
        %v417 = vmax.f32 %v341, %v411
        %v418 = vmax.f32 %v343, %v413
        %s419 = scalar_lea.vmem %s240, 64 [#allocation2]
        %v420 = vld [vmem:[%s419] sm:$0xff]
        %v421 = vld [vmem:[%s419 + $0x8] sm:$0xff]
        %v422 = vld [vmem:[%s419 + $0x10] sm:$0xff]
        %v423 = vld [vmem:[%s419 + $0x18] sm:$0x11]
        %v428 = vunpack.c.l.b16 %v420
        %v429 = vunpack.c.h.b16 %v420
        %v430 = vunpack.c.l.b16 %v421
        %v431 = vunpack.c.h.b16 %v421
        %v432 = vunpack.c.l.b16 %v422
        %v433 = vunpack.c.h.b16 %v422
        %v434 = vunpack.c.l.b16 %v423
        %v435 = vunpack.c.h.b16 %v423
        %v436 = vpack.c.b16 %v430, %v428
        %v437 = vpack.c.b16 %v431, %v429
        %v438 = vpack.c.b16 %v434, %v432
        %v439 = vpack.c.b16 %v435, %v433
        %v443 = vand.u32 %v438, %v299
        %v446 = vand.u32 %v439, %v299
        %448 = vmatprep.subr.bf16.mxu0 %v437
        %449 = vmatpush1.bf16.msra.mxu0 %v436
        %450 = vmatprep.subr.bf16.mxu0 %v446
        %451 = vmatpush1.bf16.msra.mxu0 %v443
        %452 = vmatprep.subr.bf16.mxu0 0
        %453 = vmatpush1.bf16.msra.mxu0 0
        %454 = vmatprep.subr.bf16.mxu0 0
        %455 = vmatpush1.bf16.msra.mxu0 0
        %456 = vmatprep.subr.bf16.mxu0 0
        %457 = vmatpush1.bf16.msra.mxu0 0
        %458 = vmatprep.subr.bf16.mxu0 0
        %459 = vmatpush1.bf16.msra.mxu0 0
        %460 = vmatprep.subr.bf16.mxu0 0
        %461 = vmatpush1.bf16.msra.mxu0 0
        %462 = vmatprep.subr.bf16.mxu0 0
        %463 = vmatpush1.bf16.msra.mxu0 0
        %464 = vmatprep.subr.bf16.mxu0 0
        %465 = vmatpush1.bf16.msra.mxu0 0
        %466 = vmatprep.subr.bf16.mxu0 0
        %467 = vmatpush1.bf16.msra.mxu0 0
        %468 = vmatprep.subr.bf16.mxu0 0
        %469 = vmatpush1.bf16.msra.mxu0 0
        %470 = vmatprep.subr.bf16.mxu0 0
        %471 = vmatpush1.bf16.msra.mxu0 0
        %472 = vmatprep.subr.bf16.mxu0 0
        %473 = vmatpush1.bf16.msra.mxu0 0
        %474 = vmatprep.subr.bf16.mxu0 0
        %475 = vmatpush1.bf16.msra.mxu0 0
        %476 = vmatprep.subr.bf16.mxu0 0
        %477 = vmatpush1.bf16.msra.mxu0 0
        %478 = vmatprep.subr.bf16.mxu0 0
        %479 = vmatpush1.bf16.msra.mxu0 0
        %480 = vmatprep.mubr.bf16.mxu0 0
        %481 = vmatmul.mubr.bf16.gmra.mrb[0].mxu0 %v294
        %v482 = vpop.f32.mrb[0].mxu0
        %v483 = vadd.f32 0.0, %v482
        %v484 = vpop.f32.mrb[0].mxu0
        %v485 = vadd.f32 0.0, %v484
        %v486 = vpop.f32.mrb[0].mxu0
        %v487 = vpop.f32.mrb[0].mxu0
        %488 = vdwg.mxu0
        %v489 = vmax.f32 %v417, %v483
        %v490 = vmax.f32 %v418, %v485
        %s491 = scalar_lea.vmem %s240, 96 [#allocation2]
        %v492 = vld [vmem:[%s491] sm:$0xff]
        %v493 = vld [vmem:[%s491 + $0x8] sm:$0xff]
        %v494 = vld [vmem:[%s491 + $0x10] sm:$0xff]
        %v495 = vld [vmem:[%s491 + $0x18] sm:$0x11]
        %v500 = vunpack.c.l.b16 %v492
        %v501 = vunpack.c.h.b16 %v492
        %v502 = vunpack.c.l.b16 %v493
        %v503 = vunpack.c.h.b16 %v493
        %v504 = vunpack.c.l.b16 %v494
        %v505 = vunpack.c.h.b16 %v494
        %v506 = vunpack.c.l.b16 %v495
        %v507 = vunpack.c.h.b16 %v495
        %v508 = vpack.c.b16 %v502, %v500
        %v509 = vpack.c.b16 %v503, %v501
        %v510 = vpack.c.b16 %v506, %v504
        %v511 = vpack.c.b16 %v507, %v505
        %v515 = vand.u32 %v510, %v299
        %v518 = vand.u32 %v511, %v299
        %520 = vmatprep.subr.bf16.mxu0 %v509
        %521 = vmatpush1.bf16.msra.mxu0 %v508
        %522 = vmatprep.subr.bf16.mxu0 %v518
        %523 = vmatpush1.bf16.msra.mxu0 %v515
        %524 = vmatprep.subr.bf16.mxu0 0
        %525 = vmatpush1.bf16.msra.mxu0 0
        %526 = vmatprep.subr.bf16.mxu0 0
        %527 = vmatpush1.bf16.msra.mxu0 0
        %528 = vmatprep.subr.bf16.mxu0 0
        %529 = vmatpush1.bf16.msra.mxu0 0
        %530 = vmatprep.subr.bf16.mxu0 0
        %531 = vmatpush1.bf16.msra.mxu0 0
        %532 = vmatprep.subr.bf16.mxu0 0
        %533 = vmatpush1.bf16.msra.mxu0 0
        %534 = vmatprep.subr.bf16.mxu0 0
        %535 = vmatpush1.bf16.msra.mxu0 0
        %536 = vmatprep.subr.bf16.mxu0 0
        %537 = vmatpush1.bf16.msra.mxu0 0
        %538 = vmatprep.subr.bf16.mxu0 0
        %539 = vmatpush1.bf16.msra.mxu0 0
        %540 = vmatprep.subr.bf16.mxu0 0
        %541 = vmatpush1.bf16.msra.mxu0 0
        %542 = vmatprep.subr.bf16.mxu0 0
        %543 = vmatpush1.bf16.msra.mxu0 0
        %544 = vmatprep.subr.bf16.mxu0 0
        %545 = vmatpush1.bf16.msra.mxu0 0
        %546 = vmatprep.subr.bf16.mxu0 0
        %547 = vmatpush1.bf16.msra.mxu0 0
        %548 = vmatprep.subr.bf16.mxu0 0
        %549 = vmatpush1.bf16.msra.mxu0 0
        %550 = vmatprep.subr.bf16.mxu0 0
        %551 = vmatpush1.bf16.msra.mxu0 0
        %552 = vmatprep.mubr.bf16.mxu0 0
        %553 = vmatmul.mubr.bf16.gmra.mrb[0].mxu0 %v294
        %v554 = vpop.f32.mrb[0].mxu0
        %v555 = vadd.f32 0.0, %v554
        %v556 = vpop.f32.mrb[0].mxu0
        %v557 = vadd.f32 0.0, %v556
        %v558 = vpop.f32.mrb[0].mxu0
        %v559 = vpop.f32.mrb[0].mxu0
        %560 = vdwg.mxu0
        %v561 = vmax.f32 %v489, %v555
        %v562 = vmax.f32 %v490, %v557
        %v563 = vld [vmem:[%s2] sm:$0xff]
        %565 = vset.pattern.permute.xlu0 0
        %566 = vperm.xlu0 %565, %v563
        %v567 = vpop.permute.xlu0 %566
        %v569 = vadd.f32 %v561, %v567
        %v570 = vadd.f32 %v562, %v567
        %v571 = vmax.f32 %v569, 0.0
        %v572 = vmax.f32 %v570, 0.0
        %v573 = vpack.c.bf16 %v571, %v571
        %v574 = vpack.c.bf16 %v572, %v572
        %v577 = vunpack.c.l.b16 %v573
        %v578 = vunpack.c.l.b16 %v574
        %v579 = vpack.c.b16 %v578, %v577
        %581 = vst [vmem:[%s266] sm:$0xff] %v579
        %s582 = smul.u32 2, %s14
        %p583 = scmp.lt.s32.totalorder %s582, 3
        %s584 = scalar_select %p583, %s582, 3
        %s585 = smul.addr %s584, 4
        %s586 = scalar_lea.vmem %s3, %s585
        // Predicated region
        $region71: #{cnn_forward.3} parent=65 // pred_check
          %p587 = pneg %p100
        $region72: #{cnn_forward.3} parent=65 // pred_check_branch
          %589 = sbr.rel (%p587) target = $region74
        $region73: #{cnn_forward.3} parent=65 // pred_region
          %s590 = smul.u32 2, %s14
        $region74: #{cnn_forward.3} parent=65 // pred_fallthru
          _
      $region66: #{cnn_forward.3} parent=5 // pred_fallthru
        _
      %p591 = scmp.le.s32.totalorder 2, %s9
      // Predicated region
      $region75: #{cnn_forward.3} parent=5 // pred_check
        %p592 = pneg %p591
      $region76: #{cnn_forward.3} parent=5 // pred_check_branch
        %594 = sbr.rel (%p592) target = $region78
      $region77: #{cnn_forward.3} parent=5 // pred_region
        %s595 = ssub.s32 %s9, 2
        // Predicated region
        $region79: #{cnn_forward.3} parent=77 // pred_check
          %p596 = pneg %p106
        $region80: #{cnn_forward.3} parent=77 // pred_check_branch
          %598 = sbr.rel (%p596) target = $region82
        $region81: #{cnn_forward.3} parent=77 // pred_region
          %s599 = smul.u32 2, %s15
          %p600 = scmp.lt.s32.totalorder %s599, 3
          %s601 = scalar_select %p600, %s599, 3
          %s602 = smul.addr %s601, 4
          %s603 = scalar_lea.vmem %s3, %s602
        $region82: #{cnn_forward.3} parent=77 // pred_fallthru
          _
      $region78: #{cnn_forward.3} parent=5 // pred_fallthru
        _
    $region6: #{cnn_forward.3} parent=1 // loop_footer
      %s13 = sadd.s32 1, %s9
    $region7: #{cnn_forward.3} parent=1 // loop_footer_branch
      %8 = sbr.rel target = $region3
    $region8: #{cnn_forward.3} parent=1 // loop_exit
      _

// kernel: cnn_forward.4
$region0: #{cnn_forward.4}
  #allocation0 [shape = 'u32[]', space=smem, size = 0x4, offset = 0x4, fixed_abs, tag = 'smem constant byte address 0x4 - core index']
  #allocation1 [shape = 'u32[144,128]{1,0:T(1,128)}', space=vmem, size = 0x12000, scoped, tag = 'internal scratch']
  %s0 = inlined_call_operand.vmem [shape: bf16[4,200,128], index: 0, kind: input, shape index: {}]
  %s1 = inlined_call_operand.vmem [shape: bf16[16,200], index: 1, kind: input, shape index: {}]
  %s2 = inlined_call_operand.vmem [shape: f32[16,1], index: 2, kind: input, shape index: {}]
  %s3 = inlined_call_operand.vmem [shape: bf16[16,128], index: 3, kind: output, shape index: {}]
  %s4 = sld [smem:[#allocation0]]
  $region22: #{cnn_forward.4} parent=0
    _
  %s6 = ssub.s32 1, %s4
  %s7 = scalar_select 0, %s6, %s4
  // Predicated region
  $region2: #{cnn_forward.4} parent=0 // pred_check
    _
  $region3: #{cnn_forward.4} parent=0 // pred_check_branch
    %9 = sbr.rel (0) target = $region5
  $region4: #{cnn_forward.4} parent=0 // pred_region
    _
  $region5: #{cnn_forward.4} parent=0 // pred_fallthru
    _
  // Predicated region
  $region6: #{cnn_forward.4} parent=0 // pred_check
    _
  $region7: #{cnn_forward.4} parent=0 // pred_check_branch
    %11 = sbr.rel (0) target = $region9
  $region8: #{cnn_forward.4} parent=0 // pred_region
    _
  $region9: #{cnn_forward.4} parent=0 // pred_fallthru
    _
  // Predicated region
  $region10: #{cnn_forward.4} parent=0 // pred_check
    _
  $region11: #{cnn_forward.4} parent=0 // pred_check_branch
    %13 = sbr.rel (0) target = $region13
  $region12: #{cnn_forward.4} parent=0 // pred_region
    _
  $region13: #{cnn_forward.4} parent=0 // pred_fallthru
    _
  %v15 = vld [vmem:[%s1] sm:$0xff]
  %v16 = vld [vmem:[%s1 + $0x8] sm:$0xff]
  %v17 = vld [vmem:[%s0] sm:$0xf]
  %v18 = vld [vmem:[%s0 + $0x4] sm:$0xf]
  %v19 = vld [vmem:[%s0 + $0x8] sm:$0xf]
  %v20 = vld [vmem:[%s0 + $0xc] sm:$0xf]
  %v21 = vld [vmem:[%s0 + $0x10] sm:$0xf]
  %v22 = vld [vmem:[%s0 + $0x14] sm:$0xf]
  %v23 = vld [vmem:[%s0 + $0x18] sm:$0xf]
  %v24 = vld [vmem:[%s0 + $0x1c] sm:$0xf]
  %v25 = vld [vmem:[%s0 + $0x20] sm:$0xf]
  %v26 = vld [vmem:[%s0 + $0x24] sm:$0xf]
  %v27 = vld [vmem:[%s0 + $0x28] sm:$0xf]
  %v28 = vld [vmem:[%s0 + $0x2c] sm:$0xf]
  %v29 = vld [vmem:[%s0 + $0x30] sm:$0xf]
  %v30 = vld [vmem:[%s0 + $0x34] sm:$0xf]
  %v31 = vld [vmem:[%s0 + $0x38] sm:$0xf]
  %v32 = vld [vmem:[%s0 + $0x3c] sm:$0xf]
  %v33 = vld [vmem:[%s0 + $0x40] sm:$0xf]
  %v34 = vld [vmem:[%s0 + $0x44] sm:$0xf]
  %v35 = vld [vmem:[%s0 + $0x48] sm:$0xf]
  %v36 = vld [vmem:[%s0 + $0x4c] sm:$0xf]
  %v37 = vld [vmem:[%s0 + $0x50] sm:$0xf]
  %v38 = vld [vmem:[%s0 + $0x54] sm:$0xf]
  %v39 = vld [vmem:[%s0 + $0x58] sm:$0xf]
  %v40 = vld [vmem:[%s0 + $0x5c] sm:$0xf]
  %v41 = vld [vmem:[%s0 + $0x60] sm:$0xf]
  %v44 = vunpack.c.l.b16 %v15
  %v45 = vunpack.c.h.b16 %v15
  %v46 = vunpack.c.l.b16 %v16
  %v47 = vunpack.c.h.b16 %v16
  %v48 = vpack.c.b16 %v46, %v44
  %v49 = vpack.c.b16 %v47, %v45
  %v76 = vunpack.c.l.b16 %v17
  %v77 = vunpack.c.l.b16 %v18
  %v78 = vunpack.c.l.b16 %v19
  %v79 = vunpack.c.l.b16 %v20
  %v80 = vunpack.c.l.b16 %v21
  %v81 = vunpack.c.l.b16 %v22
  %v82 = vunpack.c.l.b16 %v23
  %v83 = vunpack.c.l.b16 %v24
  %v84 = vunpack.c.l.b16 %v25
  %v85 = vunpack.c.l.b16 %v26
  %v86 = vunpack.c.l.b16 %v27
  %v87 = vunpack.c.l.b16 %v28
  %v88 = vunpack.c.l.b16 %v29
  %v89 = vunpack.c.l.b16 %v30
  %v90 = vunpack.c.l.b16 %v31
  %v91 = vunpack.c.l.b16 %v32
  %v92 = vunpack.c.l.b16 %v33
  %v93 = vunpack.c.l.b16 %v34
  %v94 = vunpack.c.l.b16 %v35
  %v95 = vunpack.c.l.b16 %v36
  %v96 = vunpack.c.l.b16 %v37
  %v97 = vunpack.c.l.b16 %v38
  %v98 = vunpack.c.l.b16 %v39
  %v99 = vunpack.c.l.b16 %v40
  %v100 = vunpack.c.l.b16 %v41
  %v101 = vpack.c.b16 %v77, %v76
  %v102 = vpack.c.b16 %v79, %v78
  %v103 = vpack.c.b16 %v81, %v80
  %v104 = vpack.c.b16 %v83, %v82
  %v105 = vpack.c.b16 %v85, %v84
  %v106 = vpack.c.b16 %v87, %v86
  %v107 = vpack.c.b16 %v89, %v88
  %v108 = vpack.c.b16 %v91, %v90
  %v109 = vpack.c.b16 %v93, %v92
  %v110 = vpack.c.b16 %v95, %v94
  %v111 = vpack.c.b16 %v97, %v96
  %v112 = vpack.c.b16 %v99, %v98
  %v113 = vpack.c.b16 %v100, %v100
  %vm126 = vcmask 588800
  %v128 = vsel %vm126, %v49, 0
  %vm130 = vcmask 1043456
  %v132 = vsel %vm130, %v113, 0
  %134 = vmatprep.subr.bf16.mxu0 0
  %135 = vmatpush1.bf16.msra.mxu0 %v101
  %136 = vmatprep.subr.bf16.mxu0 0
  %137 = vmatpush1.bf16.msra.mxu0 %v102
  %138 = vmatprep.subr.bf16.mxu0 0
  %139 = vmatpush1.bf16.msra.mxu0 %v103
  %140 = vmatprep.subr.bf16.mxu0 0
  %141 = vmatpush1.bf16.msra.mxu0 %v104
  %142 = vmatprep.subr.bf16.mxu0 0
  %143 = vmatpush1.bf16.msra.mxu0 %v105
  %144 = vmatprep.subr.bf16.mxu0 0
  %145 = vmatpush1.bf16.msra.mxu0 %v106
  %146 = vmatprep.subr.bf16.mxu0 0
  %147 = vmatpush1.bf16.msra.mxu0 %v107
  %148 = vmatprep.subr.bf16.mxu0 0
  %149 = vmatpush1.bf16.msra.mxu0 %v108
  %150 = vmatprep.subr.bf16.mxu0 0
  %151 = vmatpush1.bf16.msra.mxu0 %v109
  %152 = vmatprep.subr.bf16.mxu0 0
  %153 = vmatpush1.bf16.msra.mxu0 %v110
  %154 = vmatprep.subr.bf16.mxu0 0
  %155 = vmatpush1.bf16.msra.mxu0 %v111
  %156 = vmatprep.subr.bf16.mxu0 0
  %157 = vmatpush1.bf16.msra.mxu0 %v112
  %158 = vmatprep.subr.bf16.mxu0 0
  %159 = vmatpush1.bf16.msra.mxu0 %v132
  %160 = vmatprep.subr.bf16.mxu0 0
  %161 = vmatpush1.bf16.msra.mxu0 0
  %162 = vmatprep.subr.bf16.mxu0 0
  %163 = vmatpush1.bf16.msra.mxu0 0
  %164 = vmatprep.subr.bf16.mxu0 0
  %165 = vmatpush1.bf16.msra.mxu0 0
  %166 = vmatprep.mubr.bf16.mxu0 %v128
  %167 = vmatmul.mubr.bf16.gmra.mrb[0].mxu0 %v48
  %v168 = vpop.f32.mrb[0].mxu0
  %v169 = vadd.f32 0.0, %v168
  %v170 = vpop.f32.mrb[0].mxu0
  %v171 = vpop.f32.mrb[0].mxu0
  %v172 = vadd.f32 0.0, %v171
  %v173 = vpop.f32.mrb[0].mxu0
  %174 = vdwg.mxu0
  %s175 = scalar_lea.vmem %s0, 100
  %v176 = vld [vmem:[%s175] sm:$0xf]
  %v177 = vld [vmem:[%s175 + $0x4] sm:$0xf]
  %v178 = vld [vmem:[%s175 + $0x8] sm:$0xf]
  %v179 = vld [vmem:[%s175 + $0xc] sm:$0xf]
  %v180 = vld [vmem:[%s175 + $0x10] sm:$0xf]
  %v181 = vld [vmem:[%s175 + $0x14] sm:$0xf]
  %v182 = vld [vmem:[%s175 + $0x18] sm:$0xf]
  %v183 = vld [vmem:[%s175 + $0x1c] sm:$0xf]
  %v184 = vld [vmem:[%s175 + $0x20] sm:$0xf]
  %v185 = vld [vmem:[%s175 + $0x24] sm:$0xf]
  %v186 = vld [vmem:[%s175 + $0x28] sm:$0xf]
  %v187 = vld [vmem:[%s175 + $0x2c] sm:$0xf]
  %v188 = vld [vmem:[%s175 + $0x30] sm:$0xf]
  %v189 = vld [vmem:[%s175 + $0x34] sm:$0xf]
  %v190 = vld [vmem:[%s175 + $0x38] sm:$0xf]
  %v191 = vld [vmem:[%s175 + $0x3c] sm:$0xf]
  %v192 = vld [vmem:[%s175 + $0x40] sm:$0xf]
  %v193 = vld [vmem:[%s175 + $0x44] sm:$0xf]
  %v194 = vld [vmem:[%s175 + $0x48] sm:$0xf]
  %v195 = vld [vmem:[%s175 + $0x4c] sm:$0xf]
  %v196 = vld [vmem:[%s175 + $0x50] sm:$0xf]
  %v197 = vld [vmem:[%s175 + $0x54] sm:$0xf]
  %v198 = vld [vmem:[%s175 + $0x58] sm:$0xf]
  %v199 = vld [vmem:[%s175 + $0x5c] sm:$0xf]
  %v200 = vld [vmem:[%s175 + $0x60] sm:$0xf]
  %v226 = vunpack.c.l.b16 %v176
  %v227 = vunpack.c.l.b16 %v177
  %v228 = vunpack.c.l.b16 %v178
  %v229 = vunpack.c.l.b16 %v179
  %v230 = vunpack.c.l.b16 %v180
  %v231 = vunpack.c.l.b16 %v181
  %v232 = vunpack.c.l.b16 %v182
  %v233 = vunpack.c.l.b16 %v183
  %v234 = vunpack.c.l.b16 %v184
  %v235 = vunpack.c.l.b16 %v185
  %v236 = vunpack.c.l.b16 %v186
  %v237 = vunpack.c.l.b16 %v187
  %v238 = vunpack.c.l.b16 %v188
  %v239 = vunpack.c.l.b16 %v189
  %v240 = vunpack.c.l.b16 %v190
  %v241 = vunpack.c.l.b16 %v191
  %v242 = vunpack.c.l.b16 %v192
  %v243 = vunpack.c.l.b16 %v193
  %v244 = vunpack.c.l.b16 %v194
  %v245 = vunpack.c.l.b16 %v195
  %v246 = vunpack.c.l.b16 %v196
  %v247 = vunpack.c.l.b16 %v197
  %v248 = vunpack.c.l.b16 %v198
  %v249 = vunpack.c.l.b16 %v199
  %v250 = vunpack.c.l.b16 %v200
  %v251 = vpack.c.b16 %v227, %v226
  %v252 = vpack.c.b16 %v229, %v228
  %v253 = vpack.c.b16 %v231, %v230
  %v254 = vpack.c.b16 %v233, %v232
  %v255 = vpack.c.b16 %v235, %v234
  %v256 = vpack.c.b16 %v237, %v236
  %v257 = vpack.c.b16 %v239, %v238
  %v258 = vpack.c.b16 %v241, %v240
  %v259 = vpack.c.b16 %v243, %v242
  %v260 = vpack.c.b16 %v245, %v244
  %v261 = vpack.c.b16 %v247, %v246
  %v262 = vpack.c.b16 %v249, %v248
  %v263 = vpack.c.b16 %v250, %v250
  %v277 = vsel %vm130, %v263, 0
  %279 = vmatprep.subr.bf16.mxu0 0
  %280 = vmatpush1.bf16.msra.mxu0 %v251
  %281 = vmatprep.subr.bf16.mxu0 0
  %282 = vmatpush1.bf16.msra.mxu0 %v252
  %283 = vmatprep.subr.bf16.mxu0 0
  %284 = vmatpush1.bf16.msra.mxu0 %v253
  %285 = vmatprep.subr.bf16.mxu0 0
  %286 = vmatpush1.bf16.msra.mxu0 %v254
  %287 = vmatprep.subr.bf16.mxu0 0
  %288 = vmatpush1.bf16.msra.mxu0 %v255
  %289 = vmatprep.subr.bf16.mxu0 0
  %290 = vmatpush1.bf16.msra.mxu0 %v256
  %291 = vmatprep.subr.bf16.mxu0 0
  %292 = vmatpush1.bf16.msra.mxu0 %v257
  %293 = vmatprep.subr.bf16.mxu0 0
  %294 = vmatpush1.bf16.msra.mxu0 %v258
  %295 = vmatprep.subr.bf16.mxu0 0
  %296 = vmatpush1.bf16.msra.mxu0 %v259
  %297 = vmatprep.subr.bf16.mxu0 0
  %298 = vmatpush1.bf16.msra.mxu0 %v260
  %299 = vmatprep.subr.bf16.mxu0 0
  %300 = vmatpush1.bf16.msra.mxu0 %v261
  %301 = vmatprep.subr.bf16.mxu0 0
  %302 = vmatpush1.bf16.msra.mxu0 %v262
  %303 = vmatprep.subr.bf16.mxu0 0
  %304 = vmatpush1.bf16.msra.mxu0 %v277
  %305 = vmatprep.subr.bf16.mxu0 0
  %306 = vmatpush1.bf16.msra.mxu0 0
  %307 = vmatprep.subr.bf16.mxu0 0
  %308 = vmatpush1.bf16.msra.mxu0 0
  %309 = vmatprep.subr.bf16.mxu0 0
  %310 = vmatpush1.bf16.msra.mxu0 0
  %311 = vmatprep.mubr.bf16.mxu0 %v128
  %312 = vmatmul.mubr.bf16.gmra.mrb[0].mxu0 %v48
  %v313 = vpop.f32.mrb[0].mxu0
  %v314 = vadd.f32 0.0, %v313
  %v315 = vpop.f32.mrb[0].mxu0
  %v316 = vpop.f32.mrb[0].mxu0
  %v317 = vadd.f32 0.0, %v316
  %v318 = vpop.f32.mrb[0].mxu0
  %319 = vdwg.mxu0
  %v320 = vmax.f32 %v169, %v314
  %v321 = vmax.f32 %v172, %v317
  %s322 = scalar_lea.vmem %s0, 200
  %v323 = vld [vmem:[%s322] sm:$0xf]
  %v324 = vld [vmem:[%s322 + $0x4] sm:$0xf]
  %v325 = vld [vmem:[%s322 + $0x8] sm:$0xf]
  %v326 = vld [vmem:[%s322 + $0xc] sm:$0xf]
  %v327 = vld [vmem:[%s322 + $0x10] sm:$0xf]
  %v328 = vld [vmem:[%s322 + $0x14] sm:$0xf]
  %v329 = vld [vmem:[%s322 + $0x18] sm:$0xf]
  %v330 = vld [vmem:[%s322 + $0x1c] sm:$0xf]
  %v331 = vld [vmem:[%s322 + $0x20] sm:$0xf]
  %v332 = vld [vmem:[%s322 + $0x24] sm:$0xf]
  %v333 = vld [vmem:[%s322 + $0x28] sm:$0xf]
  %v334 = vld [vmem:[%s322 + $0x2c] sm:$0xf]
  %v335 = vld [vmem:[%s322 + $0x30] sm:$0xf]
  %v336 = vld [vmem:[%s322 + $0x34] sm:$0xf]
  %v337 = vld [vmem:[%s322 + $0x38] sm:$0xf]
  %v338 = vld [vmem:[%s322 + $0x3c] sm:$0xf]
  %v339 = vld [vmem:[%s322 + $0x40] sm:$0xf]
  %v340 = vld [vmem:[%s322 + $0x44] sm:$0xf]
  %v341 = vld [vmem:[%s322 + $0x48] sm:$0xf]
  %v342 = vld [vmem:[%s322 + $0x4c] sm:$0xf]
  %v343 = vld [vmem:[%s322 + $0x50] sm:$0xf]
  %v344 = vld [vmem:[%s322 + $0x54] sm:$0xf]
  %v345 = vld [vmem:[%s322 + $0x58] sm:$0xf]
  %v346 = vld [vmem:[%s322 + $0x5c] sm:$0xf]
  %v347 = vld [vmem:[%s322 + $0x60] sm:$0xf]
  %v373 = vunpack.c.l.b16 %v323
  %v374 = vunpack.c.l.b16 %v324
  %v375 = vunpack.c.l.b16 %v325
  %v376 = vunpack.c.l.b16 %v326
  %v377 = vunpack.c.l.b16 %v327
  %v378 = vunpack.c.l.b16 %v328
  %v379 = vunpack.c.l.b16 %v329
  %v380 = vunpack.c.l.b16 %v330
  %v381 = vunpack.c.l.b16 %v331
  %v382 = vunpack.c.l.b16 %v332
  %v383 = vunpack.c.l.b16 %v333
  %v384 = vunpack.c.l.b16 %v334
  %v385 = vunpack.c.l.b16 %v335
  %v386 = vunpack.c.l.b16 %v336
  %v387 = vunpack.c.l.b16 %v337
  %v388 = vunpack.c.l.b16 %v338
  %v389 = vunpack.c.l.b16 %v339
  %v390 = vunpack.c.l.b16 %v340
  %v391 = vunpack.c.l.b16 %v341
  %v392 = vunpack.c.l.b16 %v342
  %v393 = vunpack.c.l.b16 %v343
  %v394 = vunpack.c.l.b16 %v344
  %v395 = vunpack.c.l.b16 %v345
  %v396 = vunpack.c.l.b16 %v346
  %v397 = vunpack.c.l.b16 %v347
  %v398 = vpack.c.b16 %v374, %v373
  %v399 = vpack.c.b16 %v376, %v375
  %v400 = vpack.c.b16 %v378, %v377
  %v401 = vpack.c.b16 %v380, %v379
  %v402 = vpack.c.b16 %v382, %v381
  %v403 = vpack.c.b16 %v384, %v383
  %v404 = vpack.c.b16 %v386, %v385
  %v405 = vpack.c.b16 %v388, %v387
  %v406 = vpack.c.b16 %v390, %v389
  %v407 = vpack.c.b16 %v392, %v391
  %v408 = vpack.c.b16 %v394, %v393
  %v409 = vpack.c.b16 %v396, %v395
  %v410 = vpack.c.b16 %v397, %v397
  %v424 = vsel %vm130, %v410, 0
  %426 = vmatprep.subr.bf16.mxu0 0
  %427 = vmatpush1.bf16.msra.mxu0 %v398
  %428 = vmatprep.subr.bf16.mxu0 0
  %429 = vmatpush1.bf16.msra.mxu0 %v399
  %430 = vmatprep.subr.bf16.mxu0 0
  %431 = vmatpush1.bf16.msra.mxu0 %v400
  %432 = vmatprep.subr.bf16.mxu0 0
  %433 = vmatpush1.bf16.msra.mxu0 %v401
  %434 = vmatprep.subr.bf16.mxu0 0
  %435 = vmatpush1.bf16.msra.mxu0 %v402
  %436 = vmatprep.subr.bf16.mxu0 0
  %437 = vmatpush1.bf16.msra.mxu0 %v403
  %438 = vmatprep.subr.bf16.mxu0 0
  %439 = vmatpush1.bf16.msra.mxu0 %v404
  %440 = vmatprep.subr.bf16.mxu0 0
  %441 = vmatpush1.bf16.msra.mxu0 %v405
  %442 = vmatprep.subr.bf16.mxu0 0
  %443 = vmatpush1.bf16.msra.mxu0 %v406
  %444 = vmatprep.subr.bf16.mxu0 0
  %445 = vmatpush1.bf16.msra.mxu0 %v407
  %446 = vmatprep.subr.bf16.mxu0 0
  %447 = vmatpush1.bf16.msra.mxu0 %v408
  %448 = vmatprep.subr.bf16.mxu0 0
  %449 = vmatpush1.bf16.msra.mxu0 %v409
  %450 = vmatprep.subr.bf16.mxu0 0
  %451 = vmatpush1.bf16.msra.mxu0 %v424
  %452 = vmatprep.subr.bf16.mxu0 0
  %453 = vmatpush1.bf16.msra.mxu0 0
  %454 = vmatprep.subr.bf16.mxu0 0
  %455 = vmatpush1.bf16.msra.mxu0 0
  %456 = vmatprep.subr.bf16.mxu0 0
  %457 = vmatpush1.bf16.msra.mxu0 0
  %458 = vmatprep.mubr.bf16.mxu0 %v128
  %459 = vmatmul.mubr.bf16.gmra.mrb[0].mxu0 %v48
  %v460 = vpop.f32.mrb[0].mxu0
  %v461 = vadd.f32 0.0, %v460
  %v462 = vpop.f32.mrb[0].mxu0
  %v463 = vpop.f32.mrb[0].mxu0
  %v464 = vadd.f32 0.0, %v463
  %v465 = vpop.f32.mrb[0].mxu0
  %466 = vdwg.mxu0
  %v467 = vmax.f32 %v320, %v461
  %v468 = vmax.f32 %v321, %v464
  %s469 = scalar_lea.vmem %s0, 300
  %v470 = vld [vmem:[%s469] sm:$0xf]
  %v471 = vld [vmem:[%s469 + $0x4] sm:$0xf]
  %v472 = vld [vmem:[%s469 + $0x8] sm:$0xf]
  %v473 = vld [vmem:[%s469 + $0xc] sm:$0xf]
  %v474 = vld [vmem:[%s469 + $0x10] sm:$0xf]
  %v475 = vld [vmem:[%s469 + $0x14] sm:$0xf]
  %v476 = vld [vmem:[%s469 + $0x18] sm:$0xf]
  %v477 = vld [vmem:[%s469 + $0x1c] sm:$0xf]
  %v478 = vld [vmem:[%s469 + $0x20] sm:$0xf]
  %v479 = vld [vmem:[%s469 + $0x24] sm:$0xf]
  %v480 = vld [vmem:[%s469 + $0x28] sm:$0xf]
  %v481 = vld [vmem:[%s469 + $0x2c] sm:$0xf]
  %v482 = vld [vmem:[%s469 + $0x30] sm:$0xf]
  %v483 = vld [vmem:[%s469 + $0x34] sm:$0xf]
  %v484 = vld [vmem:[%s469 + $0x38] sm:$0xf]
  %v485 = vld [vmem:[%s469 + $0x3c] sm:$0xf]
  %v486 = vld [vmem:[%s469 + $0x40] sm:$0xf]
  %v487 = vld [vmem:[%s469 + $0x44] sm:$0xf]
  %v488 = vld [vmem:[%s469 + $0x48] sm:$0xf]
  %v489 = vld [vmem:[%s469 + $0x4c] sm:$0xf]
  %v490 = vld [vmem:[%s469 + $0x50] sm:$0xf]
  %v491 = vld [vmem:[%s469 + $0x54] sm:$0xf]
  %v492 = vld [vmem:[%s469 + $0x58] sm:$0xf]
  %v493 = vld [vmem:[%s469 + $0x5c] sm:$0xf]
  %v494 = vld [vmem:[%s469 + $0x60] sm:$0xf]
  %v520 = vunpack.c.l.b16 %v470
  %v521 = vunpack.c.l.b16 %v471
  %v522 = vunpack.c.l.b16 %v472
  %v523 = vunpack.c.l.b16 %v473
  %v524 = vunpack.c.l.b16 %v474
  %v525 = vunpack.c.l.b16 %v475
  %v526 = vunpack.c.l.b16 %v476
  %v527 = vunpack.c.l.b16 %v477
  %v528 = vunpack.c.l.b16 %v478
  %v529 = vunpack.c.l.b16 %v479
  %v530 = vunpack.c.l.b16 %v480
  %v531 = vunpack.c.l.b16 %v481
  %v532 = vunpack.c.l.b16 %v482
  %v533 = vunpack.c.l.b16 %v483
  %v534 = vunpack.c.l.b16 %v484
  %v535 = vunpack.c.l.b16 %v485
  %v536 = vunpack.c.l.b16 %v486
  %v537 = vunpack.c.l.b16 %v487
  %v538 = vunpack.c.l.b16 %v488
  %v539 = vunpack.c.l.b16 %v489
  %v540 = vunpack.c.l.b16 %v490
  %v541 = vunpack.c.l.b16 %v491
  %v542 = vunpack.c.l.b16 %v492
  %v543 = vunpack.c.l.b16 %v493
  %v544 = vunpack.c.l.b16 %v494
  %v545 = vpack.c.b16 %v521, %v520
  %v546 = vpack.c.b16 %v523, %v522
  %v547 = vpack.c.b16 %v525, %v524
  %v548 = vpack.c.b16 %v527, %v526
  %v549 = vpack.c.b16 %v529, %v528
  %v550 = vpack.c.b16 %v531, %v530
  %v551 = vpack.c.b16 %v533, %v532
  %v552 = vpack.c.b16 %v535, %v534
  %v553 = vpack.c.b16 %v537, %v536
  %v554 = vpack.c.b16 %v539, %v538
  %v555 = vpack.c.b16 %v541, %v540
  %v556 = vpack.c.b16 %v543, %v542
  %v557 = vpack.c.b16 %v544, %v544
  %v571 = vsel %vm130, %v557, 0
  %573 = vmatprep.subr.bf16.mxu0 0
  %574 = vmatpush1.bf16.msra.mxu0 %v545
  %575 = vmatprep.subr.bf16.mxu0 0
  %576 = vmatpush1.bf16.msra.mxu0 %v546
  %577 = vmatprep.subr.bf16.mxu0 0
  %578 = vmatpush1.bf16.msra.mxu0 %v547
  %579 = vmatprep.subr.bf16.mxu0 0
  %580 = vmatpush1.bf16.msra.mxu0 %v548
  %581 = vmatprep.subr.bf16.mxu0 0
  %582 = vmatpush1.bf16.msra.mxu0 %v549
  %583 = vmatprep.subr.bf16.mxu0 0
  %584 = vmatpush1.bf16.msra.mxu0 %v550
  %585 = vmatprep.subr.bf16.mxu0 0
  %586 = vmatpush1.bf16.msra.mxu0 %v551
  %587 = vmatprep.subr.bf16.mxu0 0
  %588 = vmatpush1.bf16.msra.mxu0 %v552
  %589 = vmatprep.subr.bf16.mxu0 0
  %590 = vmatpush1.bf16.msra.mxu0 %v553
  %591 = vmatprep.subr.bf16.mxu0 0
  %592 = vmatpush1.bf16.msra.mxu0 %v554
  %593 = vmatprep.subr.bf16.mxu0 0
  %594 = vmatpush1.bf16.msra.mxu0 %v555
  %595 = vmatprep.subr.bf16.mxu0 0
  %596 = vmatpush1.bf16.msra.mxu0 %v556
  %597 = vmatprep.subr.bf16.mxu0 0
  %598 = vmatpush1.bf16.msra.mxu0 %v571
  %599 = vmatprep.subr.bf16.mxu0 0
  %600 = vmatpush1.bf16.msra.mxu0 0
  %601 = vmatprep.subr.bf16.mxu0 0
  %602 = vmatpush1.bf16.msra.mxu0 0
  %603 = vmatprep.subr.bf16.mxu0 0
  %604 = vmatpush1.bf16.msra.mxu0 0
  %605 = vmatprep.mubr.bf16.mxu0 %v128
  %606 = vmatmul.mubr.bf16.gmra.mrb[0].mxu0 %v48
  %v607 = vpop.f32.mrb[0].mxu0
  %v608 = vadd.f32 0.0, %v607
  %v609 = vpop.f32.mrb[0].mxu0
  %v610 = vpop.f32.mrb[0].mxu0
  %v611 = vadd.f32 0.0, %v610
  %v612 = vpop.f32.mrb[0].mxu0
  %613 = vdwg.mxu0
  %v614 = vmax.f32 %v467, %v608
  %v615 = vmax.f32 %v468, %v611
  %v616 = vld [vmem:[%s2] sm:$0xff]
  %v617 = vld [vmem:[%s2 + $0x8] sm:$0xff]
  %619 = vset.pattern.permute.xlu0 0
  %620 = vperm.xlu0 %619, %v616
  %v621 = vpop.permute.xlu0 %620
  %624 = vset.pattern.permute.xlu0 0
  %625 = vperm.xlu0 %624, %v617
  %v626 = vpop.permute.xlu0 %625
  %v628 = vadd.f32 %v614, %v621
  %v629 = vadd.f32 %v615, %v626
  %v630 = vmax.f32 %v628, 0.0
  %v631 = vmax.f32 %v629, 0.0
  %v632 = vpack.c.bf16 %v631, %v630
  %v634 = vunpack.c.l.b16 %v632
  %v635 = vunpack.c.h.b16 %v632
  %v636 = vpack.c.b16 %v634, %v634
  %v637 = vpack.c.b16 %v635, %v635
  %640 = vst [vmem:[%s3] sm:$0xf] %v636
  %641 = vst [vmem:[%s3 + $0x4] sm:$0xf] %v637
  // Predicated region
  $region14: #{cnn_forward.4} parent=0 // pred_check
    _
  $region15: #{cnn_forward.4} parent=0 // pred_check_branch
    %643 = sbr.rel (0) target = $region17
  $region16: #{cnn_forward.4} parent=0 // pred_region
    _
  $region17: #{cnn_forward.4} parent=0 // pred_fallthru
    _
  // Predicated region
  $region18: #{cnn_forward.4} parent=0 // pred_check
    _
  $region19: #{cnn_forward.4} parent=0 // pred_check_branch
    %645 = sbr.rel (0) target = $region21
  $region20: #{cnn_forward.4} parent=0 // pred_region
    _
  $region21: #{cnn_forward.4} parent=0 // pred_fallthru
    _

// kernel: cnn_forward.5
$region0: #{cnn_forward.5}
  #allocation0 [shape = 'u32[]', space=smem, size = 0x4, offset = 0x4, fixed_abs, tag = 'smem constant byte address 0x4 - core index']
  #allocation1 [shape = 'u32[144,128]{1,0:T(1,128)}', space=vmem, size = 0x12000, scoped, tag = 'internal scratch']
  %s0 = inlined_call_operand.vmem [shape: bf16[400,128], index: 0, kind: input, shape index: {}]
  %s1 = inlined_call_operand.vmem [shape: bf16[120,400], index: 1, kind: input, shape index: {}]
  %s2 = inlined_call_operand.vmem [shape: f32[120,1], index: 2, kind: input, shape index: {}]
  %s3 = inlined_call_operand.vmem [shape: bf16[84,120], index: 3, kind: input, shape index: {}]
  %s4 = inlined_call_operand.vmem [shape: f32[84,1], index: 4, kind: input, shape index: {}]
  %s5 = inlined_call_operand.vmem [shape: bf16[16,84], index: 5, kind: input, shape index: {}]
  %s6 = inlined_call_operand.vmem [shape: f32[16,1], index: 6, kind: input, shape index: {}]
  %s7 = inlined_call_operand.vmem [shape: f32[16,128], index: 7, kind: output, shape index: {}]
  %s8 = sld [smem:[#allocation0]]
  $region38: #{cnn_forward.5} parent=0
    _
  %s10 = ssub.s32 1, %s8
  %s11 = scalar_select 0, %s10, %s8
  // Predicated region
  $region2: #{cnn_forward.5} parent=0 // pred_check
    _
  $region3: #{cnn_forward.5} parent=0 // pred_check_branch
    %13 = sbr.rel (0) target = $region5
  $region4: #{cnn_forward.5} parent=0 // pred_region
    _
  $region5: #{cnn_forward.5} parent=0 // pred_fallthru
    _
  // Predicated region
  $region6: #{cnn_forward.5} parent=0 // pred_check
    _
  $region7: #{cnn_forward.5} parent=0 // pred_check_branch
    %15 = sbr.rel (0) target = $region9
  $region8: #{cnn_forward.5} parent=0 // pred_region
    _
  $region9: #{cnn_forward.5} parent=0 // pred_fallthru
    _
  // Predicated region
  $region10: #{cnn_forward.5} parent=0 // pred_check
    _
  $region11: #{cnn_forward.5} parent=0 // pred_check_branch
    %17 = sbr.rel (0) target = $region13
  $region12: #{cnn_forward.5} parent=0 // pred_region
    _
  $region13: #{cnn_forward.5} parent=0 // pred_fallthru
    _
  // Predicated region
  $region14: #{cnn_forward.5} parent=0 // pred_check
    _
  $region15: #{cnn_forward.5} parent=0 // pred_check_branch
    %19 = sbr.rel (0) target = $region17
  $region16: #{cnn_forward.5} parent=0 // pred_region
    _
  $region17: #{cnn_forward.5} parent=0 // pred_fallthru
    _
  // Predicated region
  $region18: #{cnn_forward.5} parent=0 // pred_check
    _
  $region19: #{cnn_forward.5} parent=0 // pred_check_branch
    %21 = sbr.rel (0) target = $region21
  $region20: #{cnn_forward.5} parent=0 // pred_region
    _
  $region21: #{cnn_forward.5} parent=0 // pred_fallthru
    _
  // Predicated region
  $region22: #{cnn_forward.5} parent=0 // pred_check
    _
  $region23: #{cnn_forward.5} parent=0 // pred_check_branch
    %23 = sbr.rel (0) target = $region25
  $region24: #{cnn_forward.5} parent=0 // pred_region
    _
  $region25: #{cnn_forward.5} parent=0 // pred_fallthru
    _
  // Predicated region
  $region26: #{cnn_forward.5} parent=0 // pred_check
    _
  $region27: #{cnn_forward.5} parent=0 // pred_check_branch
    %25 = sbr.rel (0) target = $region29
  $region28: #{cnn_forward.5} parent=0 // pred_region
    _
  $region29: #{cnn_forward.5} parent=0 // pred_fallthru
    _
  %v27 = vld [vmem:[%s1] sm:$0xff]
  %v28 = vld [vmem:[%s1 + $0x8] sm:$0xff]
  %v29 = vld [vmem:[%s1 + $0x10] sm:$0xff]
  %v30 = vld [vmem:[%s1 + $0x18] sm:$0xff]
  %v31 = vld [vmem:[%s1 + $0x20] sm:$0xff]
  %v32 = vld [vmem:[%s1 + $0x28] sm:$0xff]
  %v33 = vld [vmem:[%s1 + $0x30] sm:$0xff]
  %v34 = vld [vmem:[%s1 + $0x38] sm:$0xff]
  %v35 = vld [vmem:[%s1 + $0x40] sm:$0xff]
  %v36 = vld [vmem:[%s1 + $0x48] sm:$0xff]
  %v37 = vld [vmem:[%s1 + $0x50] sm:$0xff]
  %v38 = vld [vmem:[%s1 + $0x58] sm:$0xff]
  %v39 = vld [vmem:[%s1 + $0x60] sm:$0xff]
  %v40 = vld [vmem:[%s1 + $0x68] sm:$0xff]
  %v41 = vld [vmem:[%s1 + $0x70] sm:$0xff]
  %v42 = vld [vmem:[%s1 + $0x78] sm:$0xff]
  %v43 = vld [vmem:[%s1 + $0x80] sm:$0xff]
  %v44 = vld [vmem:[%s1 + $0x88] sm:$0xff]
  %v45 = vld [vmem:[%s1 + $0x90] sm:$0xff]
  %v46 = vld [vmem:[%s1 + $0x98] sm:$0xff]
  %v47 = vld [vmem:[%s1 + $0xa0] sm:$0xff]
  %v48 = vld [vmem:[%s1 + $0xa8] sm:$0xff]
  %v49 = vld [vmem:[%s1 + $0xb0] sm:$0xff]
  %v50 = vld [vmem:[%s1 + $0xb8] sm:$0xff]
  %v51 = vld [vmem:[%s1 + $0xc0] sm:$0xff]
  %v52 = vld [vmem:[%s1 + $0xc8] sm:$0xff]
  %v53 = vld [vmem:[%s1 + $0xd0] sm:$0xff]
  %v54 = vld [vmem:[%s1 + $0xd8] sm:$0xff]
  %v55 = vld [vmem:[%s1 + $0xe0] sm:$0xff]
  %v56 = vld [vmem:[%s1 + $0xe8] sm:$0xff]
  %v57 = vld [vmem:[%s0] sm:$0xf]
  %v58 = vld [vmem:[%s0 + $0x4] sm:$0xf]
  %v59 = vld [vmem:[%s0 + $0x8] sm:$0xf]
  %v60 = vld [vmem:[%s0 + $0xc] sm:$0xf]
  %v61 = vld [vmem:[%s0 + $0x10] sm:$0xf]
  %v62 = vld [vmem:[%s0 + $0x14] sm:$0xf]
  %v63 = vld [vmem:[%s0 + $0x18] sm:$0xf]
  %v64 = vld [vmem:[%s0 + $0x1c] sm:$0xf]
  %v65 = vld [vmem:[%s0 + $0x20] sm:$0xf]
  %v66 = vld [vmem:[%s0 + $0x24] sm:$0xf]
  %v67 = vld [vmem:[%s0 + $0x28] sm:$0xf]
  %v68 = vld [vmem:[%s0 + $0x2c] sm:$0xf]
  %v69 = vld [vmem:[%s0 + $0x30] sm:$0xf]
  %v70 = vld [vmem:[%s0 + $0x34] sm:$0xf]
  %v71 = vld [vmem:[%s0 + $0x38] sm:$0xf]
  %v72 = vld [vmem:[%s0 + $0x3c] sm:$0xf]
  %v73 = vld [vmem:[%s0 + $0x40] sm:$0xf]
  %v74 = vld [vmem:[%s0 + $0x44] sm:$0xf]
  %v75 = vld [vmem:[%s0 + $0x48] sm:$0xf]
  %v76 = vld [vmem:[%s0 + $0x4c] sm:$0xf]
  %v77 = vld [vmem:[%s0 + $0x50] sm:$0xf]
  %v78 = vld [vmem:[%s0 + $0x54] sm:$0xf]
  %v79 = vld [vmem:[%s0 + $0x58] sm:$0xf]
  %v80 = vld [vmem:[%s0 + $0x5c] sm:$0xf]
  %v81 = vld [vmem:[%s0 + $0x60] sm:$0xf]
  %v82 = vld [vmem:[%s0 + $0x64] sm:$0xf]
  %v83 = vld [vmem:[%s0 + $0x68] sm:$0xf]
  %v84 = vld [vmem:[%s0 + $0x6c] sm:$0xf]
  %v85 = vld [vmem:[%s0 + $0x70] sm:$0xf]
  %v86 = vld [vmem:[%s0 + $0x74] sm:$0xf]
  %v87 = vld [vmem:[%s0 + $0x78] sm:$0xf]
  %v88 = vld [vmem:[%s0 + $0x7c] sm:$0xf]
  %v89 = vld [vmem:[%s0 + $0x80] sm:$0xf]
  %v90 = vld [vmem:[%s0 + $0x84] sm:$0xf]
  %v91 = vld [vmem:[%s0 + $0x88] sm:$0xf]
  %v92 = vld [vmem:[%s0 + $0x8c] sm:$0xf]
  %v93 = vld [vmem:[%s0 + $0x90] sm:$0xf]
  %v94 = vld [vmem:[%s0 + $0x94] sm:$0xf]
  %v95 = vld [vmem:[%s0 + $0x98] sm:$0xf]
  %v96 = vld [vmem:[%s0 + $0x9c] sm:$0xf]
  %v97 = vld [vmem:[%s0 + $0xa0] sm:$0xf]
  %v98 = vld [vmem:[%s0 + $0xa4] sm:$0xf]
  %v99 = vld [vmem:[%s0 + $0xa8] sm:$0xf]
  %v100 = vld [vmem:[%s0 + $0xac] sm:$0xf]
  %v101 = vld [vmem:[%s0 + $0xb0] sm:$0xf]
  %v102 = vld [vmem:[%s0 + $0xb4] sm:$0xf]
  %v103 = vld [vmem:[%s0 + $0xb8] sm:$0xf]
  %v104 = vld [vmem:[%s0 + $0xbc] sm:$0xf]
  %v105 = vld [vmem:[%s0 + $0xc0] sm:$0xf]
  %v106 = vld [vmem:[%s0 + $0xc4] sm:$0xf]
  %v107 = vld [vmem:[%s2] sm:$0xff]
  %v108 = vld [vmem:[%s2 + $0x8] sm:$0xff]
  %v109 = vld [vmem:[%s2 + $0x10] sm:$0xff]
  %v110 = vld [vmem:[%s2 + $0x18] sm:$0xff]
  %v111 = vld [vmem:[%s2 + $0x20] sm:$0xff]
  %v112 = vld [vmem:[%s2 + $0x28] sm:$0xff]
  %v113 = vld [vmem:[%s2 + $0x30] sm:$0xff]
  %v114 = vld [vmem:[%s2 + $0x38] sm:$0xff]
  %v115 = vld [vmem:[%s2 + $0x40] sm:$0xff]
  %v116 = vld [vmem:[%s2 + $0x48] sm:$0xff]
  %v117 = vld [vmem:[%s2 + $0x50] sm:$0xff]
  %v118 = vld [vmem:[%s2 + $0x58] sm:$0xff]
  %v119 = vld [vmem:[%s2 + $0x60] sm:$0xff]
  %v120 = vld [vmem:[%s2 + $0x68] sm:$0xff]
  %v121 = vld [vmem:[%s2 + $0x70] sm:$0xff]
  %123 = vset.pattern.permute.xlu0 0
  %124 = vperm.xlu0 %123, %v107
  %v125 = vpop.permute.xlu0 %124
  %128 = vset.pattern.permute.xlu0 0
  %129 = vperm.xlu0 %128, %v108
  %v130 = vpop.permute.xlu0 %129
  %133 = vset.pattern.permute.xlu0 0
  %134 = vperm.xlu0 %133, %v109
  %v135 = vpop.permute.xlu0 %134
  %138 = vset.pattern.permute.xlu0 0
  %139 = vperm.xlu0 %138, %v110
  %v140 = vpop.permute.xlu0 %139
  %143 = vset.pattern.permute.xlu0 0
  %144 = vperm.xlu0 %143, %v111
  %v145 = vpop.permute.xlu0 %144
  %148 = vset.pattern.permute.xlu0 0
  %149 = vperm.xlu0 %148, %v112
  %v150 = vpop.permute.xlu0 %149
  %153 = vset.pattern.permute.xlu0 0
  %154 = vperm.xlu0 %153, %v113
  %v155 = vpop.permute.xlu0 %154
  %158 = vset.pattern.permute.xlu0 0
  %159 = vperm.xlu0 %158, %v114
  %v160 = vpop.permute.xlu0 %159
  %163 = vset.pattern.permute.xlu0 0
  %164 = vperm.xlu0 %163, %v115
  %v165 = vpop.permute.xlu0 %164
  %168 = vset.pattern.permute.xlu0 0
  %169 = vperm.xlu0 %168, %v116
  %v170 = vpop.permute.xlu0 %169
  %173 = vset.pattern.permute.xlu0 0
  %174 = vperm.xlu0 %173, %v117
  %v175 = vpop.permute.xlu0 %174
  %178 = vset.pattern.permute.xlu0 0
  %179 = vperm.xlu0 %178, %v118
  %v180 = vpop.permute.xlu0 %179
  %183 = vset.pattern.permute.xlu0 0
  %184 = vperm.xlu0 %183, %v119
  %v185 = vpop.permute.xlu0 %184
  %188 = vset.pattern.permute.xlu0 0
  %189 = vperm.xlu0 %188, %v120
  %v190 = vpop.permute.xlu0 %189
  %193 = vset.pattern.permute.xlu0 0
  %194 = vperm.xlu0 %193, %v121
  %v195 = vpop.permute.xlu0 %194
  %v227 = vunpack.c.l.b16 %v27
  %v228 = vunpack.c.h.b16 %v27
  %v229 = vunpack.c.l.b16 %v28
  %v230 = vunpack.c.h.b16 %v28
  %v231 = vunpack.c.l.b16 %v29
  %v232 = vunpack.c.h.b16 %v29
  %v233 = vunpack.c.l.b16 %v30
  %v234 = vunpack.c.h.b16 %v30
  %v235 = vunpack.c.l.b16 %v31
  %v236 = vunpack.c.h.b16 %v31
  %v237 = vunpack.c.l.b16 %v32
  %v238 = vunpack.c.h.b16 %v32
  %v239 = vunpack.c.l.b16 %v33
  %v240 = vunpack.c.h.b16 %v33
  %v241 = vunpack.c.l.b16 %v34
  %v242 = vunpack.c.h.b16 %v34
  %v243 = vunpack.c.l.b16 %v35
  %v244 = vunpack.c.h.b16 %v35
  %v245 = vunpack.c.l.b16 %v36
  %v246 = vunpack.c.h.b16 %v36
  %v247 = vunpack.c.l.b16 %v37
  %v248 = vunpack.c.h.b16 %v37
  %v249 = vunpack.c.l.b16 %v38
  %v250 = vunpack.c.h.b16 %v38
  %v251 = vunpack.c.l.b16 %v39
  %v252 = vunpack.c.h.b16 %v39
  %v253 = vunpack.c.l.b16 %v40
  %v254 = vunpack.c.h.b16 %v40
  %v255 = vunpack.c.l.b16 %v41
  %v256 = vunpack.c.h.b16 %v41
  %v257 = vunpack.c.l.b16 %v42
  %v258 = vunpack.c.h.b16 %v42
  %v259 = vunpack.c.l.b16 %v43
  %v260 = vunpack.c.h.b16 %v43
  %v261 = vunpack.c.l.b16 %v44
  %v262 = vunpack.c.h.b16 %v44
  %v263 = vunpack.c.l.b16 %v45
  %v264 = vunpack.c.h.b16 %v45
  %v265 = vunpack.c.l.b16 %v46
  %v266 = vunpack.c.h.b16 %v46
  %v267 = vunpack.c.l.b16 %v47
  %v268 = vunpack.c.h.b16 %v47
  %v269 = vunpack.c.l.b16 %v48
  %v270 = vunpack.c.h.b16 %v48
  %v271 = vunpack.c.l.b16 %v49
  %v272 = vunpack.c.h.b16 %v49
  %v273 = vunpack.c.l.b16 %v50
  %v274 = vunpack.c.h.b16 %v50
  %v275 = vunpack.c.l.b16 %v51
  %v276 = vunpack.c.h.b16 %v51
  %v277 = vunpack.c.l.b16 %v52
  %v278 = vunpack.c.h.b16 %v52
  %v279 = vunpack.c.l.b16 %v53
  %v280 = vunpack.c.h.b16 %v53
  %v281 = vunpack.c.l.b16 %v54
  %v282 = vunpack.c.h.b16 %v54
  %v283 = vunpack.c.l.b16 %v55
  %v284 = vunpack.c.h.b16 %v55
  %v285 = vunpack.c.l.b16 %v56
  %v286 = vunpack.c.h.b16 %v56
  %v287 = vpack.c.b16 %v231, %v227
  %v288 = vpack.c.b16 %v232, %v228
  %v289 = vpack.c.b16 %v233, %v229
  %v290 = vpack.c.b16 %v234, %v230
  %v291 = vpack.c.b16 %v239, %v235
  %v292 = vpack.c.b16 %v240, %v236
  %v293 = vpack.c.b16 %v241, %v237
  %v294 = vpack.c.b16 %v242, %v238
  %v295 = vpack.c.b16 %v247, %v243
  %v296 = vpack.c.b16 %v248, %v244
  %v297 = vpack.c.b16 %v249, %v245
  %v298 = vpack.c.b16 %v250, %v246
  %v299 = vpack.c.b16 %v255, %v251
  %v300 = vpack.c.b16 %v256, %v252
  %v301 = vpack.c.b16 %v257, %v253
  %v302 = vpack.c.b16 %v258, %v254
  %v303 = vpack.c.b16 %v263, %v259
  %v304 = vpack.c.b16 %v264, %v260
  %v305 = vpack.c.b16 %v265, %v261
  %v306 = vpack.c.b16 %v266, %v262
  %v307 = vpack.c.b16 %v271, %v267
  %v308 = vpack.c.b16 %v272, %v268
  %v309 = vpack.c.b16 %v273, %v269
  %v310 = vpack.c.b16 %v274, %v270
  %v311 = vpack.c.b16 %v279, %v275
  %v312 = vpack.c.b16 %v280, %v276
  %v313 = vpack.c.b16 %v281, %v277
  %v314 = vpack.c.b16 %v282, %v278
  %v315 = vpack.c.b16 %v283, %v283
  %v316 = vpack.c.b16 %v284, %v284
  %v317 = vpack.c.b16 %v285, %v285
  %v318 = vpack.c.b16 %v286, %v286
  %v393 = vunpack.c.l.b16 %v57
  %v394 = vunpack.c.l.b16 %v58
  %v395 = vunpack.c.l.b16 %v59
  %v396 = vunpack.c.l.b16 %v60
  %v397 = vunpack.c.l.b16 %v61
  %v398 = vunpack.c.l.b16 %v62
  %v399 = vunpack.c.l.b16 %v63
  %v400 = vunpack.c.l.b16 %v64
  %v401 = vunpack.c.l.b16 %v65
  %v402 = vunpack.c.l.b16 %v66
  %v403 = vunpack.c.l.b16 %v67
  %v404 = vunpack.c.l.b16 %v68
  %v405 = vunpack.c.l.b16 %v69
  %v406 = vunpack.c.l.b16 %v70
  %v407 = vunpack.c.l.b16 %v71
  %v408 = vunpack.c.l.b16 %v72
  %v409 = vunpack.c.l.b16 %v73
  %v410 = vunpack.c.l.b16 %v74
  %v411 = vunpack.c.l.b16 %v75
  %v412 = vunpack.c.l.b16 %v76
  %v413 = vunpack.c.l.b16 %v77
  %v414 = vunpack.c.l.b16 %v78
  %v415 = vunpack.c.l.b16 %v79
  %v416 = vunpack.c.l.b16 %v80
  %v417 = vunpack.c.l.b16 %v81
  %v418 = vunpack.c.l.b16 %v82
  %v419 = vunpack.c.l.b16 %v83
  %v420 = vunpack.c.l.b16 %v84
  %v421 = vunpack.c.l.b16 %v85
  %v422 = vunpack.c.l.b16 %v86
  %v423 = vunpack.c.l.b16 %v87
  %v424 = vunpack.c.l.b16 %v88
  %v425 = vunpack.c.l.b16 %v89
  %v426 = vunpack.c.l.b16 %v90
  %v427 = vunpack.c.l.b16 %v91
  %v428 = vunpack.c.l.b16 %v92
  %v429 = vunpack.c.l.b16 %v93
  %v430 = vunpack.c.l.b16 %v94
  %v431 = vunpack.c.l.b16 %v95
  %v432 = vunpack.c.l.b16 %v96
  %v433 = vunpack.c.l.b16 %v97
  %v434 = vunpack.c.l.b16 %v98
  %v435 = vunpack.c.l.b16 %v99
  %v436 = vunpack.c.l.b16 %v100
  %v437 = vunpack.c.l.b16 %v101
  %v438 = vunpack.c.l.b16 %v102
  %v439 = vunpack.c.l.b16 %v103
  %v440 = vunpack.c.l.b16 %v104
  %v441 = vunpack.c.l.b16 %v105
  %v442 = vunpack.c.l.b16 %v106
  %v443 = vpack.c.b16 %v394, %v393
  %v444 = vpack.c.b16 %v396, %v395
  %v445 = vpack.c.b16 %v398, %v397
  %v446 = vpack.c.b16 %v400, %v399
  %v447 = vpack.c.b16 %v402, %v401
  %v448 = vpack.c.b16 %v404, %v403
  %v449 = vpack.c.b16 %v406, %v405
  %v450 = vpack.c.b16 %v408, %v407
  %v451 = vpack.c.b16 %v410, %v409
  %v452 = vpack.c.b16 %v412, %v411
  %v453 = vpack.c.b16 %v414, %v413
  %v454 = vpack.c.b16 %v416, %v415
  %v455 = vpack.c.b16 %v418, %v417
  %v456 = vpack.c.b16 %v420, %v419
  %v457 = vpack.c.b16 %v422, %v421
  %v458 = vpack.c.b16 %v424, %v423
  %v459 = vpack.c.b16 %v426, %v425
  %v460 = vpack.c.b16 %v428, %v427
  %v461 = vpack.c.b16 %v430, %v429
  %v462 = vpack.c.b16 %v432, %v431
  %v463 = vpack.c.b16 %v434, %v433
  %v464 = vpack.c.b16 %v436, %v435
  %v465 = vpack.c.b16 %v438, %v437
  %v466 = vpack.c.b16 %v440, %v439
  %v467 = vpack.c.b16 %v442, %v441
  %vm493 = vcmask 130048
  %v495 = vsel %vm493, %v290, 0
  %v498 = vsel %vm493, %v294, 0
  %v501 = vsel %vm493, %v298, 0
  %v504 = vsel %vm493, %v302, 0
  %v507 = vsel %vm493, %v306, 0
  %v510 = vsel %vm493, %v310, 0
  %v513 = vsel %vm493, %v314, 0
  %v516 = vsel %vm493, %v318, 0
  %518 = vmatprep.subr.bf16.mxu0 0
  %519 = vmatpush1.bf16.msra.mxu0 %v443
  %520 = vmatprep.subr.bf16.mxu0 0
  %521 = vmatpush1.bf16.msra.mxu0 %v444
  %522 = vmatprep.subr.bf16.mxu0 0
  %523 = vmatpush1.bf16.msra.mxu0 %v445
  %524 = vmatprep.subr.bf16.mxu0 0
  %525 = vmatpush1.bf16.msra.mxu0 %v446
  %526 = vmatprep.subr.bf16.mxu0 0
  %527 = vmatpush1.bf16.msra.mxu0 %v447
  %528 = vmatprep.subr.bf16.mxu0 0
  %529 = vmatpush1.bf16.msra.mxu0 %v448
  %530 = vmatprep.subr.bf16.mxu0 0
  %531 = vmatpush1.bf16.msra.mxu0 %v449
  %532 = vmatprep.subr.bf16.mxu0 0
  %533 = vmatpush1.bf16.msra.mxu0 %v450
  %534 = vmatprep.subr.bf16.mxu0 0
  %535 = vmatpush1.bf16.msra.mxu0 %v451
  %536 = vmatprep.subr.bf16.mxu0 0
  %537 = vmatpush1.bf16.msra.mxu0 %v452
  %538 = vmatprep.subr.bf16.mxu0 0
  %539 = vmatpush1.bf16.msra.mxu0 %v453
  %540 = vmatprep.subr.bf16.mxu0 0
  %541 = vmatpush1.bf16.msra.mxu0 %v454
  %542 = vmatprep.subr.bf16.mxu0 0
  %543 = vmatpush1.bf16.msra.mxu0 %v455
  %544 = vmatprep.subr.bf16.mxu0 0
  %545 = vmatpush1.bf16.msra.mxu0 %v456
  %546 = vmatprep.subr.bf16.mxu0 0
  %547 = vmatpush1.bf16.msra.mxu0 %v457
  %548 = vmatprep.subr.bf16.mxu0 0
  %549 = vmatpush1.bf16.msra.mxu0 %v458
  %550 = vmatprep.mubr.bf16.mxu0 %v288
  %551 = vmatmul.mubr.bf16.gmra.mrb[0].mxu0 %v287
  %v552 = vpop.f32.mrb[0].mxu0
  %v553 = vadd.f32 %v125, %v552
  %v554 = vpop.f32.mrb[0].mxu0
  %v555 = vpop.f32.mrb[0].mxu0
  %v556 = vadd.f32 %v130, %v555
  %v557 = vpop.f32.mrb[0].mxu0
  %558 = vmatprep.mubr.bf16.mxu0 %v292
  %559 = vmatmul.mubr.bf16.gmra.mrb[0].mxu0 %v291
  %v560 = vpop.f32.mrb[0].mxu0
  %v561 = vadd.f32 %v135, %v560
  %v562 = vpop.f32.mrb[0].mxu0
  %v563 = vpop.f32.mrb[0].mxu0
  %v564 = vadd.f32 %v140, %v563
  %v565 = vpop.f32.mrb[0].mxu0
  %566 = vmatprep.mubr.bf16.mxu0 %v296
  %567 = vmatmul.mubr.bf16.gmra.mrb[0].mxu0 %v295
  %v568 = vpop.f32.mrb[0].mxu0
  %v569 = vadd.f32 %v145, %v568
  %v570 = vpop.f32.mrb[0].mxu0
  %v571 = vpop.f32.mrb[0].mxu0
  %v572 = vadd.f32 %v150, %v571
  %v573 = vpop.f32.mrb[0].mxu0
  %574 = vmatprep.mubr.bf16.mxu0 %v300
  %575 = vmatmul.mubr.bf16.gmra.mrb[0].mxu0 %v299
  %v576 = vpop.f32.mrb[0].mxu0
  %v577 = vadd.f32 %v155, %v576
  %v578 = vpop.f32.mrb[0].mxu0
  %v579 = vpop.f32.mrb[0].mxu0
  %v580 = vadd.f32 %v160, %v579
  %v581 = vpop.f32.mrb[0].mxu0
  %582 = vmatprep.mubr.bf16.mxu0 %v304
  %583 = vmatmul.mubr.bf16.gmra.mrb[0].mxu0 %v303
  %v584 = vpop.f32.mrb[0].mxu0
  %v585 = vadd.f32 %v165, %v584
  %v586 = vpop.f32.mrb[0].mxu0
  %v587 = vpop.f32.mrb[0].mxu0
  %v588 = vadd.f32 %v170, %v587
  %v589 = vpop.f32.mrb[0].mxu0
  %590 = vmatprep.mubr.bf16.mxu0 %v308
  %591 = vmatmul.mubr.bf16.gmra.mrb[0].mxu0 %v307
  %v592 = vpop.f32.mrb[0].mxu0
  %v593 = vadd.f32 %v175, %v592
  %v594 = vpop.f32.mrb[0].mxu0
  %v595 = vpop.f32.mrb[0].mxu0
  %v596 = vadd.f32 %v180, %v595
  %v597 = vpop.f32.mrb[0].mxu0
  %598 = vmatprep.mubr.bf16.mxu0 %v312
  %599 = vmatmul.mubr.bf16.gmra.mrb[0].mxu0 %v311
  %v600 = vpop.f32.mrb[0].mxu0
  %v601 = vadd.f32 %v185, %v600
  %v602 = vpop.f32.mrb[0].mxu0
  %v603 = vpop.f32.mrb[0].mxu0
  %v604 = vadd.f32 %v190, %v603
  %v605 = vpop.f32.mrb[0].mxu0
  %606 = vmatprep.mubr.bf16.mxu0 %v316
  %607 = vmatmul.mubr.bf16.gmra.mrb[0].mxu0 %v315
  %v608 = vpop.f32.mrb[0].mxu0
  %v609 = vadd.f32 %v195, %v608
  %v610 = vpop.f32.mrb[0].mxu0
  %v611 = vpop.f32.mrb[0].mxu0
  %v612 = vpop.f32.mrb[0].mxu0
  %613 = vdwg.mxu0
  %614 = vmatprep.subr.bf16.mxu0 0
  %615 = vmatpush1.bf16.msra.mxu0 %v459
  %616 = vmatprep.subr.bf16.mxu0 0
  %617 = vmatpush1.bf16.msra.mxu0 %v460
  %618 = vmatprep.subr.bf16.mxu0 0
  %619 = vmatpush1.bf16.msra.mxu0 %v461
  %620 = vmatprep.subr.bf16.mxu0 0
  %621 = vmatpush1.bf16.msra.mxu0 %v462
  %622 = vmatprep.subr.bf16.mxu0 0
  %623 = vmatpush1.bf16.msra.mxu0 %v463
  %624 = vmatprep.subr.bf16.mxu0 0
  %625 = vmatpush1.bf16.msra.mxu0 %v464
  %626 = vmatprep.subr.bf16.mxu0 0
  %627 = vmatpush1.bf16.msra.mxu0 %v465
  %628 = vmatprep.subr.bf16.mxu0 0
  %629 = vmatpush1.bf16.msra.mxu0 %v466
  %630 = vmatprep.subr.bf16.mxu0 0
  %631 = vmatpush1.bf16.msra.mxu0 %v467
  %632 = vmatprep.subr.bf16.mxu0 0
  %633 = vmatpush1.bf16.msra.mxu0 0
  %634 = vmatprep.subr.bf16.mxu0 0
  %635 = vmatpush1.bf16.msra.mxu0 0
  %636 = vmatprep.subr.bf16.mxu0 0
  %637 = vmatpush1.bf16.msra.mxu0 0
  %638 = vmatprep.subr.bf16.mxu0 0
  %639 = vmatpush1.bf16.msra.mxu0 0
  %640 = vmatprep.subr.bf16.mxu0 0
  %641 = vmatpush1.bf16.msra.mxu0 0
  %642 = vmatprep.subr.bf16.mxu0 0
  %643 = vmatpush1.bf16.msra.mxu0 0
  %644 = vmatprep.subr.bf16.mxu0 0
  %645 = vmatpush1.bf16.msra.mxu0 0
  %646 = vmatprep.mubr.bf16.mxu0 %v495
  %647 = vmatmul.mubr.bf16.gmra.mrb[0].mxu0 %v289
  %v648 = vpop.f32.mrb[0].mxu0
  %v649 = vadd.f32 %v553, %v648
  %v650 = vpop.f32.mrb[0].mxu0
  %v651 = vpop.f32.mrb[0].mxu0
  %v652 = vadd.f32 %v556, %v651
  %v653 = vpop.f32.mrb[0].mxu0
  %654 = vmatprep.mubr.bf16.mxu0 %v498
  %655 = vmatmul.mubr.bf16.gmra.mrb[0].mxu0 %v293
  %v656 = vpop.f32.mrb[0].mxu0
  %v657 = vadd.f32 %v561, %v656
  %v658 = vpop.f32.mrb[0].mxu0
  %v659 = vpop.f32.mrb[0].mxu0
  %v660 = vadd.f32 %v564, %v659
  %v661 = vpop.f32.mrb[0].mxu0
  %662 = vmatprep.mubr.bf16.mxu0 %v501
  %663 = vmatmul.mubr.bf16.gmra.mrb[0].mxu0 %v297
  %v664 = vpop.f32.mrb[0].mxu0
  %v665 = vadd.f32 %v569, %v664
  %v666 = vpop.f32.mrb[0].mxu0
  %v667 = vpop.f32.mrb[0].mxu0
  %v668 = vadd.f32 %v572, %v667
  %v669 = vpop.f32.mrb[0].mxu0
  %670 = vmatprep.mubr.bf16.mxu0 %v504
  %671 = vmatmul.mubr.bf16.gmra.mrb[0].mxu0 %v301
  %v672 = vpop.f32.mrb[0].mxu0
  %v673 = vadd.f32 %v577, %v672
  %v674 = vpop.f32.mrb[0].mxu0
  %v675 = vpop.f32.mrb[0].mxu0
  %v676 = vadd.f32 %v580, %v675
  %v677 = vpop.f32.mrb[0].mxu0
  %678 = vmatprep.mubr.bf16.mxu0 %v507
  %679 = vmatmul.mubr.bf16.gmra.mrb[0].mxu0 %v305
  %v680 = vpop.f32.mrb[0].mxu0
  %v681 = vadd.f32 %v585, %v680
  %v682 = vpop.f32.mrb[0].mxu0
  %v683 = vpop.f32.mrb[0].mxu0
  %v684 = vadd.f32 %v588, %v683
  %v685 = vpop.f32.mrb[0].mxu0
  %686 = vmatprep.mubr.bf16.mxu0 %v510
  %687 = vmatmul.mubr.bf16.gmra.mrb[0].mxu0 %v309
  %v688 = vpop.f32.mrb[0].mxu0
  %v689 = vadd.f32 %v593, %v688
  %v690 = vpop.f32.mrb[0].mxu0
  %v691 = vpop.f32.mrb[0].mxu0
  %v692 = vadd.f32 %v596, %v691
  %v693 = vpop.f32.mrb[0].mxu0
  %694 = vmatprep.mubr.bf16.mxu0 %v513
  %695 = vmatmul.mubr.bf16.gmra.mrb[0].mxu0 %v313
  %v696 = vpop.f32.mrb[0].mxu0
  %v697 = vadd.f32 %v601, %v696
  %v698 = vpop.f32.mrb[0].mxu0
  %v699 = vpop.f32.mrb[0].mxu0
  %v700 = vadd.f32 %v604, %v699
  %v701 = vpop.f32.mrb[0].mxu0
  %702 = vmatprep.mubr.bf16.mxu0 %v516
  %703 = vmatmul.mubr.bf16.gmra.mrb[0].mxu0 %v317
  %v704 = vpop.f32.mrb[0].mxu0
  %v705 = vadd.f32 %v609, %v704
  %v706 = vpop.f32.mrb[0].mxu0
  %v707 = vpop.f32.mrb[0].mxu0
  %v708 = vpop.f32.mrb[0].mxu0
  %709 = vdwg.mxu0
  %v710 = vmax.f32 %v649, 0.0
  %v711 = vmax.f32 %v652, 0.0
  %v712 = vmax.f32 %v657, 0.0
  %v713 = vmax.f32 %v660, 0.0
  %v714 = vmax.f32 %v665, 0.0
  %v715 = vmax.f32 %v668, 0.0
  %v716 = vmax.f32 %v673, 0.0
  %v717 = vmax.f32 %v676, 0.0
  %v718 = vmax.f32 %v681, 0.0
  %v719 = vmax.f32 %v684, 0.0
  %v720 = vmax.f32 %v689, 0.0
  %v721 = vmax.f32 %v692, 0.0
  %v722 = vmax.f32 %v697, 0.0
  %v723 = vmax.f32 %v700, 0.0
  %v724 = vmax.f32 %v705, 0.0
  %v725 = vpack.c.bf16 %v711, %v710
  %v726 = vpack.c.bf16 %v713, %v712
  %v727 = vpack.c.bf16 %v715, %v714
  %v728 = vpack.c.bf16 %v717, %v716
  %v729 = vpack.c.bf16 %v719, %v718
  %v730 = vpack.c.bf16 %v721, %v720
  %v731 = vpack.c.bf16 %v723, %v722
  %v732 = vpack.c.bf16 %v724, %v724
  %v733 = vld [vmem:[%s3] sm:$0xf]
  %v734 = vld [vmem:[%s3 + $0x4] sm:$0xf]
  %v735 = vld [vmem:[%s3 + $0x8] sm:$0xf]
  %v736 = vld [vmem:[%s3 + $0xc] sm:$0xf]
  %v737 = vld [vmem:[%s3 + $0x10] sm:$0xf]
  %v738 = vld [vmem:[%s3 + $0x14] sm:$0xf]
  %v739 = vld [vmem:[%s3 + $0x18] sm:$0xf]
  %v740 = vld [vmem:[%s3 + $0x1c] sm:$0xf]
  %v741 = vld [vmem:[%s3 + $0x20] sm:$0xf]
  %v742 = vld [vmem:[%s3 + $0x24] sm:$0xf]
  %v743 = vld [vmem:[%s3 + $0x28] sm:$0x3]
  %v744 = vld [vmem:[%s4] sm:$0xff]
  %v745 = vld [vmem:[%s4 + $0x8] sm:$0xff]
  %v746 = vld [vmem:[%s4 + $0x10] sm:$0xff]
  %v747 = vld [vmem:[%s4 + $0x18] sm:$0xff]
  %v748 = vld [vmem:[%s4 + $0x20] sm:$0xff]
  %v749 = vld [vmem:[%s4 + $0x28] sm:$0xff]
  %v750 = vld [vmem:[%s4 + $0x30] sm:$0xff]
  %v751 = vld [vmem:[%s4 + $0x38] sm:$0xff]
  %v752 = vld [vmem:[%s4 + $0x40] sm:$0xff]
  %v753 = vld [vmem:[%s4 + $0x48] sm:$0xff]
  %v754 = vld [vmem:[%s4 + $0x50] sm:$0xf]
  %756 = vset.pattern.permute.xlu0 0
  %757 = vperm.xlu0 %756, %v744
  %v758 = vpop.permute.xlu0 %757
  %761 = vset.pattern.permute.xlu0 0
  %762 = vperm.xlu0 %761, %v745
  %v763 = vpop.permute.xlu0 %762
  %766 = vset.pattern.permute.xlu0 0
  %767 = vperm.xlu0 %766, %v746
  %v768 = vpop.permute.xlu0 %767
  %771 = vset.pattern.permute.xlu0 0
  %772 = vperm.xlu0 %771, %v747
  %v773 = vpop.permute.xlu0 %772
  %776 = vset.pattern.permute.xlu0 0
  %777 = vperm.xlu0 %776, %v748
  %v778 = vpop.permute.xlu0 %777
  %781 = vset.pattern.permute.xlu0 0
  %782 = vperm.xlu0 %781, %v749
  %v783 = vpop.permute.xlu0 %782
  %786 = vset.pattern.permute.xlu0 0
  %787 = vperm.xlu0 %786, %v750
  %v788 = vpop.permute.xlu0 %787
  %791 = vset.pattern.permute.xlu0 0
  %792 = vperm.xlu0 %791, %v751
  %v793 = vpop.permute.xlu0 %792
  %796 = vset.pattern.permute.xlu0 0
  %797 = vperm.xlu0 %796, %v752
  %v798 = vpop.permute.xlu0 %797
  %801 = vset.pattern.permute.xlu0 0
  %802 = vperm.xlu0 %801, %v753
  %v803 = vpop.permute.xlu0 %802
  %806 = vset.pattern.permute.xlu0 0
  %807 = vperm.xlu0 %806, %v754
  %v808 = vpop.permute.xlu0 %807
  %v821 = vunpack.c.l.b16 %v733
  %v822 = vunpack.c.l.b16 %v734
  %v823 = vunpack.c.l.b16 %v735
  %v824 = vunpack.c.l.b16 %v736
  %v825 = vunpack.c.l.b16 %v737
  %v826 = vunpack.c.l.b16 %v738
  %v827 = vunpack.c.l.b16 %v739
  %v828 = vunpack.c.l.b16 %v740
  %v829 = vunpack.c.l.b16 %v741
  %v830 = vunpack.c.l.b16 %v742
  %v831 = vunpack.c.l.b16 %v743
  %v832 = vpack.c.b16 %v822, %v821
  %v833 = vpack.c.b16 %v824, %v823
  %v834 = vpack.c.b16 %v826, %v825
  %v835 = vpack.c.b16 %v828, %v827
  %v836 = vpack.c.b16 %v830, %v829
  %v837 = vpack.c.b16 %v831, %v831
  %vm838 = vcmask 982016
  %v840 = vsel %vm838, %v832, 0
  %v843 = vsel %vm838, %v833, 0
  %v846 = vsel %vm838, %v834, 0
  %v849 = vsel %vm838, %v835, 0
  %v852 = vsel %vm838, %v836, 0
  %v855 = vsel %vm838, %v837, 0
  %vm857 = vcmask 1043456
  %v859 = vsel %vm857, %v732, 0
  %861 = vmatprep.subr.bf16.mxu0 0
  %862 = vmatpush1.bf16.msra.mxu0 %v725
  %863 = vmatprep.subr.bf16.mxu0 0
  %864 = vmatpush1.bf16.msra.mxu0 %v726
  %865 = vmatprep.subr.bf16.mxu0 0
  %866 = vmatpush1.bf16.msra.mxu0 %v727
  %867 = vmatprep.subr.bf16.mxu0 0
  %868 = vmatpush1.bf16.msra.mxu0 %v728
  %869 = vmatprep.subr.bf16.mxu0 0
  %870 = vmatpush1.bf16.msra.mxu0 %v729
  %871 = vmatprep.subr.bf16.mxu0 0
  %872 = vmatpush1.bf16.msra.mxu0 %v730
  %873 = vmatprep.subr.bf16.mxu0 0
  %874 = vmatpush1.bf16.msra.mxu0 %v731
  %875 = vmatprep.subr.bf16.mxu0 0
  %876 = vmatpush1.bf16.msra.mxu0 %v859
  %877 = vmatprep.subr.bf16.mxu0 0
  %878 = vmatpush1.bf16.msra.mxu0 0
  %879 = vmatprep.subr.bf16.mxu0 0
  %880 = vmatpush1.bf16.msra.mxu0 0
  %881 = vmatprep.subr.bf16.mxu0 0
  %882 = vmatpush1.bf16.msra.mxu0 0
  %883 = vmatprep.subr.bf16.mxu0 0
  %884 = vmatpush1.bf16.msra.mxu0 0
  %885 = vmatprep.subr.bf16.mxu0 0
  %886 = vmatpush1.bf16.msra.mxu0 0
  %887 = vmatprep.subr.bf16.mxu0 0
  %888 = vmatpush1.bf16.msra.mxu0 0
  %889 = vmatprep.subr.bf16.mxu0 0
  %890 = vmatpush1.bf16.msra.mxu0 0
  %891 = vmatprep.subr.bf16.mxu0 0
  %892 = vmatpush1.bf16.msra.mxu0 0
  %893 = vmatprep.mubr.bf16.mxu0 0
  %894 = vmatmul.mubr.bf16.gmra.mrb[0].mxu0 %v840
  %v895 = vpop.f32.mrb[0].mxu0
  %v896 = vadd.f32 %v758, %v895
  %v897 = vpop.f32.mrb[0].mxu0
  %v898 = vpop.f32.mrb[0].mxu0
  %v899 = vadd.f32 %v763, %v898
  %v900 = vpop.f32.mrb[0].mxu0
  %901 = vmatprep.mubr.bf16.mxu0 0
  %902 = vmatmul.mubr.bf16.gmra.mrb[0].mxu0 %v843
  %v903 = vpop.f32.mrb[0].mxu0
  %v904 = vadd.f32 %v768, %v903
  %v905 = vpop.f32.mrb[0].mxu0
  %v906 = vpop.f32.mrb[0].mxu0
  %v907 = vadd.f32 %v773, %v906
  %v908 = vpop.f32.mrb[0].mxu0
  %909 = vmatprep.mubr.bf16.mxu0 0
  %910 = vmatmul.mubr.bf16.gmra.mrb[0].mxu0 %v846
  %v911 = vpop.f32.mrb[0].mxu0
  %v912 = vadd.f32 %v778, %v911
  %v913 = vpop.f32.mrb[0].mxu0
  %v914 = vpop.f32.mrb[0].mxu0
  %v915 = vadd.f32 %v783, %v914
  %v916 = vpop.f32.mrb[0].mxu0
  %917 = vmatprep.mubr.bf16.mxu0 0
  %918 = vmatmul.mubr.bf16.gmra.mrb[0].mxu0 %v849
  %v919 = vpop.f32.mrb[0].mxu0
  %v920 = vadd.f32 %v788, %v919
  %v921 = vpop.f32.mrb[0].mxu0
  %v922 = vpop.f32.mrb[0].mxu0
  %v923 = vadd.f32 %v793, %v922
  %v924 = vpop.f32.mrb[0].mxu0
  %925 = vmatprep.mubr.bf16.mxu0 0
  %926 = vmatmul.mubr.bf16.gmra.mrb[0].mxu0 %v852
  %v927 = vpop.f32.mrb[0].mxu0
  %v928 = vadd.f32 %v798, %v927
  %v929 = vpop.f32.mrb[0].mxu0
  %v930 = vpop.f32.mrb[0].mxu0
  %v931 = vadd.f32 %v803, %v930
  %v932 = vpop.f32.mrb[0].mxu0
  %933 = vmatprep.mubr.bf16.mxu0 0
  %934 = vmatmul.mubr.bf16.gmra.mrb[0].mxu0 %v855
  %v935 = vpop.f32.mrb[0].mxu0
  %v936 = vadd.f32 %v808, %v935
  %v937 = vpop.f32.mrb[0].mxu0
  %v938 = vpop.f32.mrb[0].mxu0
  %v939 = vpop.f32.mrb[0].mxu0
  %940 = vdwg.mxu0
  %v941 = vmax.f32 %v896, 0.0
  %v942 = vmax.f32 %v899, 0.0
  %v943 = vmax.f32 %v904, 0.0
  %v944 = vmax.f32 %v907, 0.0
  %v945 = vmax.f32 %v912, 0.0
  %v946 = vmax.f32 %v915, 0.0
  %v947 = vmax.f32 %v920, 0.0
  %v948 = vmax.f32 %v923, 0.0
  %v949 = vmax.f32 %v928, 0.0
  %v950 = vmax.f32 %v931, 0.0
  %v951 = vmax.f32 %v936, 0.0
  %v952 = vpack.c.bf16 %v942, %v941
  %v953 = vpack.c.bf16 %v944, %v943
  %v954 = vpack.c.bf16 %v946, %v945
  %v955 = vpack.c.bf16 %v948, %v947
  %v956 = vpack.c.bf16 %v950, %v949
  %v957 = vpack.c.bf16 %v951, %v951
  %v958 = vld [vmem:[%s5] sm:$0xf]
  %v959 = vld [vmem:[%s5 + $0x4] sm:$0xf]
  %v960 = vld [vmem:[%s6] sm:$0xff]
  %v961 = vld [vmem:[%s6 + $0x8] sm:$0xff]
  %963 = vset.pattern.permute.xlu0 0
  %964 = vperm.xlu0 %963, %v960
  %v965 = vpop.permute.xlu0 %964
  %968 = vset.pattern.permute.xlu0 0
  %969 = vperm.xlu0 %968, %v961
  %v970 = vpop.permute.xlu0 %969
  %v974 = vunpack.c.l.b16 %v958
  %v975 = vunpack.c.l.b16 %v959
  %v976 = vpack.c.b16 %v975, %v974
  %vm977 = vcmask 687104
  %v979 = vsel %vm977, %v976, 0
  %vm981 = vcmask 1041408
  %v983 = vsel %vm981, %v957, 0
  %985 = vmatprep.subr.bf16.mxu0 0
  %986 = vmatpush1.bf16.msra.mxu0 %v952
  %987 = vmatprep.subr.bf16.mxu0 0
  %988 = vmatpush1.bf16.msra.mxu0 %v953
  %989 = vmatprep.subr.bf16.mxu0 0
  %990 = vmatpush1.bf16.msra.mxu0 %v954
  %991 = vmatprep.subr.bf16.mxu0 0
  %992 = vmatpush1.bf16.msra.mxu0 %v955
  %993 = vmatprep.subr.bf16.mxu0 0
  %994 = vmatpush1.bf16.msra.mxu0 %v956
  %995 = vmatprep.subr.bf16.mxu0 0
  %996 = vmatpush1.bf16.msra.mxu0 %v983
  %997 = vmatprep.subr.bf16.mxu0 0
  %998 = vmatpush1.bf16.msra.mxu0 0
  %999 = vmatprep.subr.bf16.mxu0 0
  %1000 = vmatpush1.bf16.msra.mxu0 0
  %1001 = vmatprep.subr.bf16.mxu0 0
  %1002 = vmatpush1.bf16.msra.mxu0 0
  %1003 = vmatprep.subr.bf16.mxu0 0
  %1004 = vmatpush1.bf16.msra.mxu0 0
  %1005 = vmatprep.subr.bf16.mxu0 0
  %1006 = vmatpush1.bf16.msra.mxu0 0
  %1007 = vmatprep.subr.bf16.mxu0 0
  %1008 = vmatpush1.bf16.msra.mxu0 0
  %1009 = vmatprep.subr.bf16.mxu0 0
  %1010 = vmatpush1.bf16.msra.mxu0 0
  %1011 = vmatprep.subr.bf16.mxu0 0
  %1012 = vmatpush1.bf16.msra.mxu0 0
  %1013 = vmatprep.subr.bf16.mxu0 0
  %1014 = vmatpush1.bf16.msra.mxu0 0
  %1015 = vmatprep.subr.bf16.mxu0 0
  %1016 = vmatpush1.bf16.msra.mxu0 0
  %1017 = vmatprep.mubr.bf16.mxu0 0
  %1018 = vmatmul.mubr.bf16.gmra.mrb[0].mxu0 %v979
  %v1019 = vpop.f32.mrb[0].mxu0
  %v1020 = vadd.f32 %v965, %v1019
  %v1021 = vpop.f32.mrb[0].mxu0
  %v1022 = vpop.f32.mrb[0].mxu0
  %v1023 = vadd.f32 %v970, %v1022
  %v1024 = vpop.f32.mrb[0].mxu0
  %1025 = vdwg.mxu0
  %1026 = vst [vmem:[%s7] sm:$0xff] %v1020
  %1027 = vst [vmem:[%s7 + $0x8] sm:$0xff] %v1023
  // Predicated region
  $region30: #{cnn_forward.5} parent=0 // pred_check
    _
  $region31: #{cnn_forward.5} parent=0 // pred_check_branch
    %1029 = sbr.rel (0) target = $region33
  $region32: #{cnn_forward.5} parent=0 // pred_region
    _
  $region33: #{cnn_forward.5} parent=0 // pred_fallthru
    _
  // Predicated region
  $region34: #{cnn_forward.5} parent=0 // pred_check
    _
  $region35: #{cnn_forward.5} parent=0 // pred_check_branch
    %1031 = sbr.rel (0) target = $region37
  $region36: #{cnn_forward.5} parent=0 // pred_region
    _
  $region37: #{cnn_forward.5} parent=0 // pred_fallthru
    _

</llo_original>
